<compile_context>
chip_gen: v5e
topology: v5e:2x2
jax: 0.10.0
libtpu: 0.0.40
codegen_flags: <defaults>
</compile_context>

<pallas_src>
import functools

import jax
import jax.numpy as jnp
from jax.experimental import pallas as pl
from jax.experimental.pallas import tpu as pltpu


# ----------------------------- Pallas kernel ------------------------------ #
def transformer_block_kernel(
    x_ref,                                   # (TQ, D)  f32 current query tile
    ln1_s_ref, ln1_b_ref,                    # (1, D)   f32 LayerNorm 1
    wqkv_ref, bqkv_ref,                      # (D, 3D) bf16, (1, 3D) f32  (Q|K|V fused)
    wo_ref, bo_ref,                          # (D, D) bf16, (1, D) f32   out_proj
    ln2_s_ref, ln2_b_ref,                    # (1, D)   f32 LayerNorm 2
    w1_ref, b1_ref,                          # (D, 4D) bf16, (1, 4D) f32  FF up
    w2_ref, b2_ref,                          # (4D, D) bf16, (1, D) f32   FF down
    o_ref,                                   # (TQ, D)  output tile
    k_scr, v_scr,                            # (H, T, hd) bf16, persist across tq steps
    q_scr,                                   # (H, TQ, hd) bf16
    m_scr, l_scr,                            # (H, TQ, 1)  f32 online-softmax state
    acc_scr,                                 # (H, TQ, hd) f32 online-softmax accumulator
    ctx_scr,                                 # (TQ, D)  f32 context reassembly
    *, num_heads: int,
):
    f32 = jnp.float32
    bf16 = jnp.bfloat16
    TQ, D = x_ref.shape
    H = num_heads
    hd = D // H
    eps = 1e-5
    scale = 1.0 / (hd ** 0.5)
    neg_big = -1e30                          # finite fill -> no NaNs, exp() -> 0

    def layernorm(z, s, b):                  # f32 VPU/EUP math (unbiased=False)
        m = jnp.mean(z, axis=-1, keepdims=True)
        v = jnp.mean((z - m) ** 2, axis=-1, keepdims=True)
        return ((z - m) / jnp.sqrt(v + eps)) * s + b

    # NOTE: correctness of the incremental K/V cache relies on the grid being
    # (b: "parallel", tq: "arbitrary") so every b's tq steps run in order on
    # one core; do not mark the tq axis parallel.
    tq = pl.program_id(1)
    row0 = pl.multiple_of(tq * TQ, TQ)

    # ---- LN1 + fused QKV projection for THIS tile only (incremental K/V) ----
    x_t = x_ref[...]                                                 # (TQ, D) f32
    xn1 = layernorm(x_t, ln1_s_ref[...], ln1_b_ref[...])
    qkv = jnp.dot(xn1.astype(bf16), wqkv_ref[...],
                  preferred_element_type=f32) + bqkv_ref[...]        # (TQ, 3D) f32
    q = qkv[:, :D] * scale                   # fold softmax scale into q (once)
    for h in range(H):                       # static, store-only head split
        q_scr[h] = q[:, h * hd:(h + 1) * hd].astype(bf16)
        k_scr[h, pl.ds(row0, TQ), :] = (
            qkv[:, D + h * hd:D + (h + 1) * hd].astype(bf16))
        v_scr[h, pl.ds(row0, TQ), :] = (
            qkv[:, 2 * D + h * hd:2 * D + (h + 1) * hd].astype(bf16))

    qh = q_scr[...]                                                  # (H, TQ, hd) bf16

    # ---- causal flash attention: loop only over the tq+1 visible key tiles ----
    m_scr[...] = jnp.full_like(m_scr, neg_big)
    l_scr[...] = jnp.zeros_like(l_scr)
    acc_scr[...] = jnp.zeros_like(acc_scr)

    def kv_step(kt, carry):
        k0 = pl.multiple_of(kt * TQ, TQ)
        kh = k_scr[:, pl.ds(k0, TQ), :]                              # (H, TK, hd) bf16
        vh = v_scr[:, pl.ds(k0, TQ), :]
        s = jnp.einsum('hqd,hkd->hqk', qh, kh,
                       preferred_element_type=f32)                   # (H, TQ, TK) f32
        # Head-invariant causal mask (2-D iota/compare, broadcast over heads).
        qpos = row0 + jax.lax.broadcasted_iota(jnp.int32, (TQ, TQ), 0)
        kpos = k0 + jax.lax.broadcasted_iota(jnp.int32, (TQ, TQ), 1)
        s = jnp.where((qpos >= kpos)[None, :, :], s, neg_big)
        m_prev = m_scr[...]
        m_new = jnp.maximum(m_prev, jnp.max(s, axis=-1, keepdims=True))
        a = jnp.exp(m_prev - m_new)
        p = jnp.exp(s - m_new)                                       # unnormalized
        l_scr[...] = a * l_scr[...] + jnp.sum(p, axis=-1, keepdims=True)
        acc_scr[...] = a * acc_scr[...] + jnp.einsum(
            'hqk,hkd->hqd', p.astype(bf16), vh, preferred_element_type=f32)
        m_scr[...] = m_new
        return carry

    jax.lax.fori_loop(0, tq + 1, kv_step, 0)

    # Deferred normalization: divide the (H, TQ, hd) accumulator, not (H, TQ, T).
    ctx_h = acc_scr[...] * pl.reciprocal(l_scr[...], approx=True)    # (H, TQ, hd) f32
    # TODO(synk): attention-weight dropout omitted (identity, eval mode)

    for h in range(H):                       # reassemble (TQ, D) via scratch
        ctx_scr[:, h * hd:(h + 1) * hd] = ctx_h[h]
    ctx = ctx_scr[...]                                               # (TQ, D) f32

    attn = jnp.dot(ctx.astype(bf16), wo_ref[...],
                   preferred_element_type=f32) + bo_ref[...]
    x1 = x_t + attn                          # residual 1 (drop_shortcut = identity)

    # -------- LayerNorm 2 + FeedForward (Linear -> GELU(tanh) -> Linear) --------
    xn2 = layernorm(x1, ln2_s_ref[...], ln2_b_ref[...])
    h1 = jnp.dot(xn2.astype(bf16), w1_ref[...],
                 preferred_element_type=f32) + b1_ref[...]           # (TQ, 4D) f32
    c = jnp.sqrt(jnp.float32(2.0 / jnp.pi))
    g = 0.5 * h1 * (1.0 + jnp.tanh(c * (h1 + 0.044715 * h1 * h1 * h1)))
    ff = jnp.dot(g.astype(bf16), w2_ref[...],
                 preferred_element_type=f32) + b2_ref[...]

    o_ref[...] = (x1 + ff).astype(o_ref.dtype)  # residual 2, lane-dense (TQ, D) store


# ------------------------------- Wrapper ----------------------------------- #
def transformer_block(x, params, num_heads, *, q_tile=None):
    (ln1_s, ln1_b, wq, bq, wk, bk, wv, bv, wo, bo,
     ln2_s, ln2_b, w1, b1, w2, b2) = params
    B, T, D = x.shape
    D4 = 4 * D
    assert D % num_heads == 0
    hd = D // num_heads

    try:
        kind = jax.devices()[0].device_kind.lower()
    except Exception:
        kind = ""

    # Generation-aware query tile: v6e/v7x prefer 256 (2x256x256 MXU), v5e 128.
    if q_tile is None:
        prefer = 128 if "v5" in kind else 256
        q_tile = T
        for cand in (prefer, 256, 128, 64, 32, 16, 8):
            if cand <= T and T % cand == 0:
                q_tile = cand
                break
    assert T % q_tile == 0 and (q_tile % 8 == 0 or q_tile == T)
    NT = T // q_tile

    bf16 = jnp.bfloat16
    # Fuse Q|K|V projection weights; cast all MXU weights to bf16 in the wrapper
    # (halves HBM traffic + VMEM).  Biases / LN params stay f32.
    wqkv = jnp.concatenate([wq, wk, wv], axis=1).astype(bf16)        # (D, 3D)
    bqkv = jnp.concatenate([bq, bk, bv], axis=1).astype(jnp.float32)  # (1, 3D)
    args = (x, ln1_s, ln1_b,
            wqkv, bqkv,
            wo.astype(bf16), bo,
            ln2_s, ln2_b,
            w1.astype(bf16), b1,
            w2.astype(bf16), b2)

    # Generation-aware VMEM budget: 64 MiB physical on v7x, 128 MiB elsewhere.
    vmem_limit = (48 if "v7" in kind else 96) * 1024 * 1024

    cost = pl.CostEstimate(
        flops=int(24 * B * T * D * D + 2 * B * T * T * D),   # causal ~halves attention
        transcendentals=int(B * T * (num_heads * (T // 2) + 4 * D)),
        bytes_accessed=int(8 * B * T * D + 24 * D * D),
    )

    kernel = functools.partial(transformer_block_kernel, num_heads=num_heads)

    def pspec(shape):
        # Grid-invariant operands (weights / biases / LN params).
        return pl.BlockSpec(shape, lambda b, t: (0,) * len(shape))

    in_specs = [
        pl.BlockSpec((None, q_tile, D), lambda b, t: (b, t, 0)),  # x (query tile only)
        pspec((1, D)), pspec((1, D)),                             # ln1 scale / shift
        pspec((D, 3 * D)), pspec((1, 3 * D)),                     # W_qkv, b_qkv (fused)
        pspec((D, D)), pspec((1, D)),                             # Wo, bo
        pspec((1, D)), pspec((1, D)),                             # ln2 scale / shift
        pspec((D, D4)), pspec((1, D4)),                           # FF W1, b1
        pspec((D4, D)), pspec((1, D)),                            # FF W2, b2
    ]
    out_spec = pl.BlockSpec((None, q_tile, D), lambda b, t: (b, t, 0))
    scratch = [
        pltpu.VMEM((num_heads, T, hd), bf16),          # K head-major cache (per b)
        pltpu.VMEM((num_heads, T, hd), bf16),          # V head-major cache (per b)
        pltpu.VMEM((num_heads, q_tile, hd), bf16),     # Q tile head-major
        pltpu.VMEM((num_heads, q_tile, 1), jnp.float32),   # online-softmax m
        pltpu.VMEM((num_heads, q_tile, 1), jnp.float32),   # online-softmax l
        pltpu.VMEM((num_heads, q_tile, hd), jnp.float32),  # online-softmax acc
        pltpu.VMEM((q_tile, D), jnp.float32),          # context reassembly
    ]

    return pl.pallas_call(
        kernel,
        out_shape=jax.ShapeDtypeStruct((B, T, D), x.dtype),
        grid=(B, NT),
        in_specs=in_specs,
        out_specs=out_spec,
        scratch_shapes=scratch,
        compiler_params=pltpu.CompilerParams(
            dimension_semantics=("parallel", "arbitrary"),
            vmem_limit_bytes=vmem_limit),
        cost_estimate=cost,
    )(*args)


# --------------------------- Reference (pure JAX) --------------------------- #
def transformer_block_ref(x, params, num_heads):
    (ln1_s, ln1_b, wq, bq, wk, bk, wv, bv, wo, bo,
     ln2_s, ln2_b, w1, b1, w2, b2) = params
    B, T, D = x.shape
    hd = D // num_heads
    eps = 1e-5

    def ln(z, s, b):
        m = jnp.mean(z, axis=-1, keepdims=True)
        v = jnp.mean((z - m) ** 2, axis=-1, keepdims=True)
        return ((z - m) / jnp.sqrt(v + eps)) * s + b

    xn1 = ln(x, ln1_s, ln1_b)
    q = xn1 @ wq + bq
    k = xn1 @ wk + bk
    v = xn1 @ wv + bv
    q = q.reshape(B, T, num_heads, hd).transpose(0, 2, 1, 3)
    k = k.reshape(B, T, num_heads, hd).transpose(0, 2, 1, 3)
    v = v.reshape(B, T, num_heads, hd).transpose(0, 2, 1, 3)
    s = jnp.einsum("bhqd,bhkd->bhqk", q, k) / jnp.sqrt(jnp.float32(hd))
    mask = jnp.tril(jnp.ones((T, T), dtype=bool))
    s = jnp.where(mask, s, -jnp.inf)
    p = jax.nn.softmax(s, axis=-1)
    ctx = jnp.einsum("bhqk,bhkd->bhqd", p, v).transpose(0, 2, 1, 3).reshape(B, T, D)
    x1 = x + (ctx @ wo + bo)

    xn2 = ln(x1, ln2_s, ln2_b)
    h1 = xn2 @ w1 + b1
    c = jnp.sqrt(jnp.float32(2.0 / jnp.pi))
    g = 0.5 * h1 * (1.0 + jnp.tanh(c * (h1 + 0.044715 * h1 ** 3)))
    return x1 + (g @ w2 + b2)


# --------------------------------- Main ------------------------------------ #
if __name__ == "__main__":
    # Small GPT-2-style config (T chosen so the demo exercises 2 query tiles,
    # i.e. both the incremental K/V cache and the causal key-tile loop).
    cfg = dict(emb_dim=32, context_length=16, n_heads=4, drop_rate=0.0, qkv_bias=True)
    B, T, D = 2, cfg["context_length"], cfg["emb_dim"]
    D4 = 4 * D

    key = jax.random.PRNGKey(0)
    keys = jax.random.split(key, 8)

    def winit(k, shape):
        return (0.02 * jax.random.normal(k, shape)).astype(jnp.float32)

    params = (
        jnp.ones((1, D), jnp.float32),        # ln1 scale
        jnp.zeros((1, D), jnp.float32),       # ln1 shift
        winit(keys[0], (D, D)), jnp.zeros((1, D), jnp.float32),    # Wq, bq
        winit(keys[1], (D, D)), jnp.zeros((1, D), jnp.float32),    # Wk, bk
        winit(keys[2], (D, D)), jnp.zeros((1, D), jnp.float32),    # Wv, bv
        winit(keys[3], (D, D)), jnp.zeros((1, D), jnp.float32),    # Wo, bo
        jnp.ones((1, D), jnp.float32),        # ln2 scale
        jnp.zeros((1, D), jnp.float32),       # ln2 shift
        winit(keys[4], (D, D4)), jnp.zeros((1, D4), jnp.float32),  # FF W1, b1
        winit(keys[5], (D4, D)), jnp.zeros((1, D), jnp.float32),   # FF W2, b2
    )

    x = jax.random.normal(keys[6], (B, T, D), dtype=jnp.float32)

    out = transformer_block(x, params, cfg["n_heads"], q_tile=8)   # 2 query tiles
    out = jax.block_until_ready(out)

    ref = transformer_block_ref(x, params, cfg["n_heads"])
    assert out.shape == (B, T, D)
    max_err = float(jnp.max(jnp.abs(out - ref)))
    # bf16 MXU operands + approx reciprocal -> relaxed tolerance vs f32 reference.
    assert jnp.allclose(out, ref, atol=2e-2, rtol=2e-2), (
        f"mismatch vs reference (max abs err {max_err})")

    print("KERNEL_OK")
</pallas_src>

<mosaic_0001>
module attributes {stable_mosaic.version = 11 : i64} {
  func.func @transformer_block_kernel(%arg0: i32, %arg1: i32, %arg2: memref<1x8x32xf32, #tpu.memory_space<vmem>>, %arg3: memref<1x32xf32, #tpu.memory_space<vmem>>, %arg4: memref<1x32xf32, #tpu.memory_space<vmem>>, %arg5: memref<32x96xbf16, #tpu.memory_space<vmem>>, %arg6: memref<1x96xf32, #tpu.memory_space<vmem>>, %arg7: memref<32x32xbf16, #tpu.memory_space<vmem>>, %arg8: memref<1x32xf32, #tpu.memory_space<vmem>>, %arg9: memref<1x32xf32, #tpu.memory_space<vmem>>, %arg10: memref<1x32xf32, #tpu.memory_space<vmem>>, %arg11: memref<32x128xbf16, #tpu.memory_space<vmem>>, %arg12: memref<1x128xf32, #tpu.memory_space<vmem>>, %arg13: memref<128x32xbf16, #tpu.memory_space<vmem>>, %arg14: memref<1x32xf32, #tpu.memory_space<vmem>>, %arg15: memref<1x8x32xf32, #tpu.memory_space<vmem>>, %arg16: memref<4x16x8xbf16, #tpu.memory_space<vmem>>, %arg17: memref<4x16x8xbf16, #tpu.memory_space<vmem>>, %arg18: memref<4x8x8xbf16, #tpu.memory_space<vmem>>, %arg19: memref<4x8x1xf32, #tpu.memory_space<vmem>>, %arg20: memref<4x8x1xf32, #tpu.memory_space<vmem>>, %arg21: memref<4x8x8xf32, #tpu.memory_space<vmem>>, %arg22: memref<8x32xf32, #tpu.memory_space<vmem>>) attributes {dimension_semantics = [#tpu.dimension_semantics<parallel>, #tpu.dimension_semantics<arbitrary>], iteration_bounds = array<i64: 2, 2>, scalar_prefetch = 0 : i64, scratch_operands = 7 : i64, tpu.core_type = #tpu.core_type<tc>, window_params = [{transform_indices = @transform_0, window_bounds = array<i64: 1, 8, 32>}, {pipeline_mode = #tpu.pipeline_mode<synchronous>, transform_indices = @transform_1, window_bounds = array<i64: 1, 32>}, {pipeline_mode = #tpu.pipeline_mode<synchronous>, transform_indices = @transform_2, window_bounds = array<i64: 1, 32>}, {pipeline_mode = #tpu.pipeline_mode<synchronous>, transform_indices = @transform_3, window_bounds = array<i64: 32, 96>}, {pipeline_mode = #tpu.pipeline_mode<synchronous>, transform_indices = @transform_4, window_bounds = array<i64: 1, 96>}, {pipeline_mode = #tpu.pipeline_mode<synchronous>, transform_indices = @transform_5, window_bounds = array<i64: 32, 32>}, {pipeline_mode = #tpu.pipeline_mode<synchronous>, transform_indices = @transform_6, window_bounds = array<i64: 1, 32>}, {pipeline_mode = #tpu.pipeline_mode<synchronous>, transform_indices = @transform_7, window_bounds = array<i64: 1, 32>}, {pipeline_mode = #tpu.pipeline_mode<synchronous>, transform_indices = @transform_8, window_bounds = array<i64: 1, 32>}, {pipeline_mode = #tpu.pipeline_mode<synchronous>, transform_indices = @transform_9, window_bounds = array<i64: 32, 128>}, {pipeline_mode = #tpu.pipeline_mode<synchronous>, transform_indices = @transform_10, window_bounds = array<i64: 1, 128>}, {pipeline_mode = #tpu.pipeline_mode<synchronous>, transform_indices = @transform_11, window_bounds = array<i64: 128, 32>}, {pipeline_mode = #tpu.pipeline_mode<synchronous>, transform_indices = @transform_12, window_bounds = array<i64: 1, 32>}, {transform_indices = @transform_13, window_bounds = array<i64: 1, 8, 32>}]} {
    %c8_i32 = arith.constant 8 : i32
    %0 = arith.muli %arg1, %c8_i32 : i32
    %1 = tpu.assume_multiple %0, 8 : i32
    %c0 = arith.constant 0 : index
    %c0_0 = arith.constant 0 : index
    %c0_1 = arith.constant 0 : index
    %2 = vector.load %arg2[%c0, %c0_0, %c0_1] : memref<1x8x32xf32, #tpu.memory_space<vmem>>, vector<1x8x32xf32>
    %3 = vector.shape_cast %2 : vector<1x8x32xf32> to vector<8x32xf32>
    %c0_2 = arith.constant 0 : index
    %c0_3 = arith.constant 0 : index
    %4 = vector.load %arg3[%c0_2, %c0_3] : memref<1x32xf32, #tpu.memory_space<vmem>>, vector<1x32xf32>
    %c0_4 = arith.constant 0 : index
    %c0_5 = arith.constant 0 : index
    %5 = vector.load %arg4[%c0_4, %c0_5] : memref<1x32xf32, #tpu.memory_space<vmem>>, vector<1x32xf32>
    %cst = arith.constant dense<0.000000e+00> : vector<8xf32>
    %6 = vector.multi_reduction <add>, %3, %cst [1] : vector<8x32xf32> to vector<8xf32>
    %7 = vector.shape_cast %6 : vector<8xf32> to vector<8x1xf32>
    %cst_6 = arith.constant 3.200000e+01 : f32
    %8 = vector.broadcast %cst_6 : f32 to vector<8x1xf32>
    %9 = arith.divf %7, %8 : vector<8x1xf32>
    %10 = vector.broadcast %9 : vector<8x1xf32> to vector<8x32xf32>
    %11 = arith.subf %3, %10 : vector<8x32xf32>
    %12 = arith.mulf %11, %11 : vector<8x32xf32>
    %cst_7 = arith.constant dense<0.000000e+00> : vector<8xf32>
    %13 = vector.multi_reduction <add>, %12, %cst_7 [1] : vector<8x32xf32> to vector<8xf32>
    %14 = vector.shape_cast %13 : vector<8xf32> to vector<8x1xf32>
    %cst_8 = arith.constant 3.200000e+01 : f32
    %15 = vector.broadcast %cst_8 : f32 to vector<8x1xf32>
    %16 = arith.divf %14, %15 : vector<8x1xf32>
    %17 = vector.broadcast %9 : vector<8x1xf32> to vector<8x32xf32>
    %18 = arith.subf %3, %17 : vector<8x32xf32>
    %cst_9 = arith.constant 9.99999974E-6 : f32
    %19 = vector.broadcast %cst_9 : f32 to vector<8x1xf32>
    %20 = arith.addf %16, %19 : vector<8x1xf32>
    %21 = math.sqrt %20 : vector<8x1xf32>
    %22 = vector.broadcast %21 : vector<8x1xf32> to vector<8x32xf32>
    %23 = arith.divf %18, %22 : vector<8x32xf32>
    %24 = vector.broadcast %4 : vector<1x32xf32> to vector<8x32xf32>
    %25 = arith.mulf %23, %24 : vector<8x32xf32>
    %26 = vector.broadcast %5 : vector<1x32xf32> to vector<8x32xf32>
    %27 = arith.addf %25, %26 : vector<8x32xf32>
    %28 = arith.truncf %27 : vector<8x32xf32> to vector<8x32xbf16>
    %c0_10 = arith.constant 0 : index
    %c0_11 = arith.constant 0 : index
    %29 = vector.load %arg5[%c0_10, %c0_11] : memref<32x96xbf16, #tpu.memory_space<vmem>>, vector<32x96xbf16>
    %cst_12 = arith.constant dense<0.000000e+00> : vector<8x96xf32>
    %30 = tpu.matmul %28, %29, %cst_12 {dimension_numbers = #tpu.dot_dimension_numbers<[1], [0], [0], [1], [0, 0, 1, 1], [], []>} : vector<8x32xbf16>, vector<32x96xbf16>, vector<8x96xf32> -> vector<8x96xf32>
    %c0_13 = arith.constant 0 : index
    %c0_14 = arith.constant 0 : index
    %31 = vector.load %arg6[%c0_13, %c0_14] : memref<1x96xf32, #tpu.memory_space<vmem>>, vector<1x96xf32>
    %32 = vector.broadcast %31 : vector<1x96xf32> to vector<8x96xf32>
    %33 = arith.addf %30, %32 : vector<8x96xf32>
    %34 = vector.extract_strided_slice %33 {offsets = [0, 0], sizes = [8, 32], strides = [1, 1]} : vector<8x96xf32> to vector<8x32xf32>
    %cst_15 = arith.constant 0.353553385 : f32
    %35 = vector.broadcast %cst_15 : f32 to vector<8x32xf32>
    %36 = arith.mulf %34, %35 : vector<8x32xf32>
    %37 = vector.extract_strided_slice %36 {offsets = [0, 0], sizes = [8, 8], strides = [1, 1]} : vector<8x32xf32> to vector<8x8xf32>
    %38 = arith.truncf %37 : vector<8x8xf32> to vector<8x8xbf16>
    %c0_16 = arith.constant 0 : index
    %c0_17 = arith.constant 0 : index
    %c0_18 = arith.constant 0 : index
    %39 = vector.load %arg18[%c0_16, %c0_17, %c0_18] : memref<4x8x8xbf16, #tpu.memory_space<vmem>>, vector<1x8x8xbf16>
    %40 = vector.shape_cast %39 : vector<1x8x8xbf16> to vector<8x8xbf16>
    %41 = vector.shape_cast %38 : vector<8x8xbf16> to vector<1x8x8xbf16>
    tpu.vector_store %arg18[%c0_16, %c0_17, %c0_18], %41 {strides = array<i32>} : memref<4x8x8xbf16, #tpu.memory_space<vmem>>, vector<1x8x8xbf16>,
    %42 = vector.extract_strided_slice %33 {offsets = [0, 32], sizes = [8, 8], strides = [1, 1]} : vector<8x96xf32> to vector<8x8xf32>
    %43 = arith.truncf %42 : vector<8x8xf32> to vector<8x8xbf16>
    %c0_19 = arith.constant 0 : index
    %44 = arith.index_cast %1 : i32 to index
    %c0_20 = arith.constant 0 : index
    %45 = vector.load %arg16[%c0_19, %44, %c0_20] : memref<4x16x8xbf16, #tpu.memory_space<vmem>>, vector<1x8x8xbf16>
    %46 = vector.shape_cast %45 : vector<1x8x8xbf16> to vector<8x8xbf16>
    %47 = vector.shape_cast %43 : vector<8x8xbf16> to vector<1x8x8xbf16>
    tpu.vector_store %arg16[%c0_19, %44, %c0_20], %47 {strides = array<i32>} : memref<4x16x8xbf16, #tpu.memory_space<vmem>>, vector<1x8x8xbf16>,
    %48 = vector.extract_strided_slice %33 {offsets = [0, 64], sizes = [8, 8], strides = [1, 1]} : vector<8x96xf32> to vector<8x8xf32>
    %49 = arith.truncf %48 : vector<8x8xf32> to vector<8x8xbf16>
    %c0_21 = arith.constant 0 : index
    %50 = arith.index_cast %1 : i32 to index
    %c0_22 = arith.constant 0 : index
    %51 = vector.load %arg17[%c0_21, %50, %c0_22] : memref<4x16x8xbf16, #tpu.memory_space<vmem>>, vector<1x8x8xbf16>
    %52 = vector.shape_cast %51 : vector<1x8x8xbf16> to vector<8x8xbf16>
    %53 = vector.shape_cast %49 : vector<8x8xbf16> to vector<1x8x8xbf16>
    tpu.vector_store %arg17[%c0_21, %50, %c0_22], %53 {strides = array<i32>} : memref<4x16x8xbf16, #tpu.memory_space<vmem>>, vector<1x8x8xbf16>,
    %54 = vector.extract_strided_slice %36 {offsets = [0, 8], sizes = [8, 8], strides = [1, 1]} : vector<8x32xf32> to vector<8x8xf32>
    %55 = arith.truncf %54 : vector<8x8xf32> to vector<8x8xbf16>
    %c1 = arith.constant 1 : index
    %c0_23 = arith.constant 0 : index
    %c0_24 = arith.constant 0 : index
    %56 = vector.load %arg18[%c1, %c0_23, %c0_24] : memref<4x8x8xbf16, #tpu.memory_space<vmem>>, vector<1x8x8xbf16>
    %57 = vector.shape_cast %56 : vector<1x8x8xbf16> to vector<8x8xbf16>
    %58 = vector.shape_cast %55 : vector<8x8xbf16> to vector<1x8x8xbf16>
    tpu.vector_store %arg18[%c1, %c0_23, %c0_24], %58 {strides = array<i32>} : memref<4x8x8xbf16, #tpu.memory_space<vmem>>, vector<1x8x8xbf16>,
    %59 = vector.extract_strided_slice %33 {offsets = [0, 40], sizes = [8, 8], strides = [1, 1]} : vector<8x96xf32> to vector<8x8xf32>
    %60 = arith.truncf %59 : vector<8x8xf32> to vector<8x8xbf16>
    %c1_25 = arith.constant 1 : index
    %61 = arith.index_cast %1 : i32 to index
    %c0_26 = arith.constant 0 : index
    %62 = vector.load %arg16[%c1_25, %61, %c0_26] : memref<4x16x8xbf16, #tpu.memory_space<vmem>>, vector<1x8x8xbf16>
    %63 = vector.shape_cast %62 : vector<1x8x8xbf16> to vector<8x8xbf16>
    %64 = vector.shape_cast %60 : vector<8x8xbf16> to vector<1x8x8xbf16>
    tpu.vector_store %arg16[%c1_25, %61, %c0_26], %64 {strides = array<i32>} : memref<4x16x8xbf16, #tpu.memory_space<vmem>>, vector<1x8x8xbf16>,
    %65 = vector.extract_strided_slice %33 {offsets = [0, 72], sizes = [8, 8], strides = [1, 1]} : vector<8x96xf32> to vector<8x8xf32>
    %66 = arith.truncf %65 : vector<8x8xf32> to vector<8x8xbf16>
    %c1_27 = arith.constant 1 : index
    %67 = arith.index_cast %1 : i32 to index
    %c0_28 = arith.constant 0 : index
    %68 = vector.load %arg17[%c1_27, %67, %c0_28] : memref<4x16x8xbf16, #tpu.memory_space<vmem>>, vector<1x8x8xbf16>
    %69 = vector.shape_cast %68 : vector<1x8x8xbf16> to vector<8x8xbf16>
    %70 = vector.shape_cast %66 : vector<8x8xbf16> to vector<1x8x8xbf16>
    tpu.vector_store %arg17[%c1_27, %67, %c0_28], %70 {strides = array<i32>} : memref<4x16x8xbf16, #tpu.memory_space<vmem>>, vector<1x8x8xbf16>,
    %71 = vector.extract_strided_slice %36 {offsets = [0, 16], sizes = [8, 8], strides = [1, 1]} : vector<8x32xf32> to vector<8x8xf32>
    %72 = arith.truncf %71 : vector<8x8xf32> to vector<8x8xbf16>
    %c2 = arith.constant 2 : index
    %c0_29 = arith.constant 0 : index
    %c0_30 = arith.constant 0 : index
    %73 = vector.load %arg18[%c2, %c0_29, %c0_30] : memref<4x8x8xbf16, #tpu.memory_space<vmem>>, vector<1x8x8xbf16>
    %74 = vector.shape_cast %73 : vector<1x8x8xbf16> to vector<8x8xbf16>
    %75 = vector.shape_cast %72 : vector<8x8xbf16> to vector<1x8x8xbf16>
    tpu.vector_store %arg18[%c2, %c0_29, %c0_30], %75 {strides = array<i32>} : memref<4x8x8xbf16, #tpu.memory_space<vmem>>, vector<1x8x8xbf16>,
    %76 = vector.extract_strided_slice %33 {offsets = [0, 48], sizes = [8, 8], strides = [1, 1]} : vector<8x96xf32> to vector<8x8xf32>
    %77 = arith.truncf %76 : vector<8x8xf32> to vector<8x8xbf16>
    %c2_31 = arith.constant 2 : index
    %78 = arith.index_cast %1 : i32 to index
    %c0_32 = arith.constant 0 : index
    %79 = vector.load %arg16[%c2_31, %78, %c0_32] : memref<4x16x8xbf16, #tpu.memory_space<vmem>>, vector<1x8x8xbf16>
    %80 = vector.shape_cast %79 : vector<1x8x8xbf16> to vector<8x8xbf16>
    %81 = vector.shape_cast %77 : vector<8x8xbf16> to vector<1x8x8xbf16>
    tpu.vector_store %arg16[%c2_31, %78, %c0_32], %81 {strides = array<i32>} : memref<4x16x8xbf16, #tpu.memory_space<vmem>>, vector<1x8x8xbf16>,
    %82 = vector.extract_strided_slice %33 {offsets = [0, 80], sizes = [8, 8], strides = [1, 1]} : vector<8x96xf32> to vector<8x8xf32>
    %83 = arith.truncf %82 : vector<8x8xf32> to vector<8x8xbf16>
    %c2_33 = arith.constant 2 : index
    %84 = arith.index_cast %1 : i32 to index
    %c0_34 = arith.constant 0 : index
    %85 = vector.load %arg17[%c2_33, %84, %c0_34] : memref<4x16x8xbf16, #tpu.memory_space<vmem>>, vector<1x8x8xbf16>
    %86 = vector.shape_cast %85 : vector<1x8x8xbf16> to vector<8x8xbf16>
    %87 = vector.shape_cast %83 : vector<8x8xbf16> to vector<1x8x8xbf16>
    tpu.vector_store %arg17[%c2_33, %84, %c0_34], %87 {strides = array<i32>} : memref<4x16x8xbf16, #tpu.memory_space<vmem>>, vector<1x8x8xbf16>,
    %88 = vector.extract_strided_slice %36 {offsets = [0, 24], sizes = [8, 8], strides = [1, 1]} : vector<8x32xf32> to vector<8x8xf32>
    %89 = arith.truncf %88 : vector<8x8xf32> to vector<8x8xbf16>
    %c3 = arith.constant 3 : index
    %c0_35 = arith.constant 0 : index
    %c0_36 = arith.constant 0 : index
    %90 = vector.load %arg18[%c3, %c0_35, %c0_36] : memref<4x8x8xbf16, #tpu.memory_space<vmem>>, vector<1x8x8xbf16>
    %91 = vector.shape_cast %90 : vector<1x8x8xbf16> to vector<8x8xbf16>
    %92 = vector.shape_cast %89 : vector<8x8xbf16> to vector<1x8x8xbf16>
    tpu.vector_store %arg18[%c3, %c0_35, %c0_36], %92 {strides = array<i32>} : memref<4x8x8xbf16, #tpu.memory_space<vmem>>, vector<1x8x8xbf16>,
    %93 = vector.extract_strided_slice %33 {offsets = [0, 56], sizes = [8, 8], strides = [1, 1]} : vector<8x96xf32> to vector<8x8xf32>
    %94 = arith.truncf %93 : vector<8x8xf32> to vector<8x8xbf16>
    %c3_37 = arith.constant 3 : index
    %95 = arith.index_cast %1 : i32 to index
    %c0_38 = arith.constant 0 : index
    %96 = vector.load %arg16[%c3_37, %95, %c0_38] : memref<4x16x8xbf16, #tpu.memory_space<vmem>>, vector<1x8x8xbf16>
    %97 = vector.shape_cast %96 : vector<1x8x8xbf16> to vector<8x8xbf16>
    %98 = vector.shape_cast %94 : vector<8x8xbf16> to vector<1x8x8xbf16>
    tpu.vector_store %arg16[%c3_37, %95, %c0_38], %98 {strides = array<i32>} : memref<4x16x8xbf16, #tpu.memory_space<vmem>>, vector<1x8x8xbf16>,
    %99 = vector.extract_strided_slice %33 {offsets = [0, 88], sizes = [8, 8], strides = [1, 1]} : vector<8x96xf32> to vector<8x8xf32>
    %100 = arith.truncf %99 : vector<8x8xf32> to vector<8x8xbf16>
    %c3_39 = arith.constant 3 : index
    %101 = arith.index_cast %1 : i32 to index
    %c0_40 = arith.constant 0 : index
    %102 = vector.load %arg17[%c3_39, %101, %c0_40] : memref<4x16x8xbf16, #tpu.memory_space<vmem>>, vector<1x8x8xbf16>
    %103 = vector.shape_cast %102 : vector<1x8x8xbf16> to vector<8x8xbf16>
    %104 = vector.shape_cast %100 : vector<8x8xbf16> to vector<1x8x8xbf16>
    tpu.vector_store %arg17[%c3_39, %101, %c0_40], %104 {strides = array<i32>} : memref<4x16x8xbf16, #tpu.memory_space<vmem>>, vector<1x8x8xbf16>,
    %c0_41 = arith.constant 0 : index
    %c0_42 = arith.constant 0 : index
    %c0_43 = arith.constant 0 : index
    %105 = vector.load %arg18[%c0_41, %c0_42, %c0_43] : memref<4x8x8xbf16, #tpu.memory_space<vmem>>, vector<4x8x8xbf16>
    %cst_44 = arith.constant -1.000000e+30 : f32
    %106 = vector.broadcast %cst_44 : f32 to vector<4x8x1xf32>
    %c0_45 = arith.constant 0 : index
    %c0_46 = arith.constant 0 : index
    %c0_47 = arith.constant 0 : index
    %107 = vector.load %arg19[%c0_45, %c0_46, %c0_47] : memref<4x8x1xf32, #tpu.memory_space<vmem>>, vector<4x8x1xf32>
    tpu.vector_store %arg19[%c0_45, %c0_46, %c0_47], %106 {strides = array<i32>} : memref<4x8x1xf32, #tpu.memory_space<vmem>>, vector<4x8x1xf32>,
    %cst_48 = arith.constant 0.000000e+00 : f32
    %108 = vector.broadcast %cst_48 : f32 to vector<4x8x1xf32>
    %c0_49 = arith.constant 0 : index
    %c0_50 = arith.constant 0 : index
    %c0_51 = arith.constant 0 : index
    %109 = vector.load %arg20[%c0_49, %c0_50, %c0_51] : memref<4x8x1xf32, #tpu.memory_space<vmem>>, vector<4x8x1xf32>
    tpu.vector_store %arg20[%c0_49, %c0_50, %c0_51], %108 {strides = array<i32>} : memref<4x8x1xf32, #tpu.memory_space<vmem>>, vector<4x8x1xf32>,
    %cst_52 = arith.constant 0.000000e+00 : f32
    %110 = vector.broadcast %cst_52 : f32 to vector<4x8x8xf32>
    %c0_53 = arith.constant 0 : index
    %c0_54 = arith.constant 0 : index
    %c0_55 = arith.constant 0 : index
    %111 = vector.load %arg21[%c0_53, %c0_54, %c0_55] : memref<4x8x8xf32, #tpu.memory_space<vmem>>, vector<4x8x8xf32>
    tpu.vector_store %arg21[%c0_53, %c0_54, %c0_55], %110 {strides = array<i32>} : memref<4x8x8xf32, #tpu.memory_space<vmem>>, vector<4x8x8xf32>,
    %c1_i32 = arith.constant 1 : i32
    %112 = arith.addi %arg1, %c1_i32 : i32
    %c0_i32 = arith.constant 0 : i32
    %c0_i32_56 = arith.constant 0 : i32
    %113 = arith.subi %112, %c0_i32_56 : i32
    %114 = arith.addi %c0_i32_56, %113 : i32
    %c1_i32_57 = arith.constant 1 : i32
    scf.for %arg23 = %c0_i32_56 to %114 step %c1_i32_57  : i32 {
      %c8_i32_102 = arith.constant 8 : i32
      %194 = arith.muli %arg23, %c8_i32_102 : i32
      %195 = tpu.assume_multiple %194, 8 : i32
      %c0_103 = arith.constant 0 : index
      %196 = arith.index_cast %195 : i32 to index
      %c0_104 = arith.constant 0 : index
      %197 = vector.load %arg16[%c0_103, %196, %c0_104] : memref<4x16x8xbf16, #tpu.memory_space<vmem>>, vector<4x8x8xbf16>
      %c0_105 = arith.constant 0 : index
      %198 = arith.index_cast %195 : i32 to index
      %c0_106 = arith.constant 0 : index
      %199 = vector.load %arg17[%c0_105, %198, %c0_106] : memref<4x16x8xbf16, #tpu.memory_space<vmem>>, vector<4x8x8xbf16>
      "tpu.trace_start"() <{level = 10 : i32, message = "hqd,hkd->hqk"}> : () -> ()
      %cst_107 = arith.constant dense<0.000000e+00> : vector<4x8x8xf32>
      %200 = tpu.matmul %105, %197, %cst_107 {dimension_numbers = #tpu.dot_dimension_numbers<[2], [2], [1], [1], [0, 0, 0, 1, 1, 1], [0], [0]>} : vector<4x8x8xbf16>, vector<4x8x8xbf16>, vector<4x8x8xf32> -> vector<4x8x8xf32>
      "tpu.trace_stop"() : () -> ()
      %201 = tpu.iota {dimensions = array<i32: 0>} : vector<8x8xi32>
      %202 = vector.broadcast %1 : i32 to vector<8x8xi32>
      %203 = arith.addi %202, %201 : vector<8x8xi32>
      %204 = tpu.iota {dimensions = array<i32: 1>} : vector<8x8xi32>
      %205 = vector.broadcast %195 : i32 to vector<8x8xi32>
      %206 = arith.addi %205, %204 : vector<8x8xi32>
      %207 = arith.cmpi sge, %203, %206 : vector<8x8xi32>
      %208 = vector.shape_cast %207 : vector<8x8xi1> to vector<1x8x8xi1>
      %cst_108 = arith.constant -1.000000e+30 : f32
      %209 = vector.shape_cast %208 : vector<1x8x8xi1> to vector<1x8x8xi1>
      %210 = vector.broadcast %209 : vector<1x8x8xi1> to vector<4x8x8xi1>
      %211 = vector.broadcast %cst_108 : f32 to vector<4x8x8xf32>
      %212 = arith.select %210, %200, %211 : vector<4x8x8xi1>, vector<4x8x8xf32>
      %c0_109 = arith.constant 0 : index
      %c0_110 = arith.constant 0 : index
      %c0_111 = arith.constant 0 : index
      %213 = vector.load %arg19[%c0_109, %c0_110, %c0_111] : memref<4x8x1xf32, #tpu.memory_space<vmem>>, vector<4x8x1xf32>
      %cst_112 = arith.constant dense<0xFF800000> : vector<4x8xf32>
      %214 = vector.multi_reduction <maximumf>, %212, %cst_112 [2] : vector<4x8x8xf32> to vector<4x8xf32>
      %215 = vector.shape_cast %214 : vector<4x8xf32> to vector<4x8x1xf32>
      %216 = arith.maximumf %213, %215 : vector<4x8x1xf32>
      %217 = arith.subf %213, %216 : vector<4x8x1xf32>
      %218 = math.exp %217 : vector<4x8x1xf32>
      %219 = vector.broadcast %216 : vector<4x8x1xf32> to vector<4x8x8xf32>
      %220 = arith.subf %212, %219 : vector<4x8x8xf32>
      %221 = math.exp %220 : vector<4x8x8xf32>
      %c0_113 = arith.constant 0 : index
      %c0_114 = arith.constant 0 : index
      %c0_115 = arith.constant 0 : index
      %222 = vector.load %arg20[%c0_113, %c0_114, %c0_115] : memref<4x8x1xf32, #tpu.memory_space<vmem>>, vector<4x8x1xf32>
      %223 = arith.mulf %218, %222 : vector<4x8x1xf32>
      %cst_116 = arith.constant dense<0.000000e+00> : vector<4x8xf32>
      %224 = vector.multi_reduction <add>, %221, %cst_116 [2] : vector<4x8x8xf32> to vector<4x8xf32>
      %225 = vector.shape_cast %224 : vector<4x8xf32> to vector<4x8x1xf32>
      %226 = arith.addf %223, %225 : vector<4x8x1xf32>
      %c0_117 = arith.constant 0 : index
      %c0_118 = arith.constant 0 : index
      %c0_119 = arith.constant 0 : index
      %227 = vector.load %arg20[%c0_117, %c0_118, %c0_119] : memref<4x8x1xf32, #tpu.memory_space<vmem>>, vector<4x8x1xf32>
      tpu.vector_store %arg20[%c0_117, %c0_118, %c0_119], %226 {strides = array<i32>} : memref<4x8x1xf32, #tpu.memory_space<vmem>>, vector<4x8x1xf32>,
      %c0_120 = arith.constant 0 : index
      %c0_121 = arith.constant 0 : index
      %c0_122 = arith.constant 0 : index
      %228 = vector.load %arg21[%c0_120, %c0_121, %c0_122] : memref<4x8x8xf32, #tpu.memory_space<vmem>>, vector<4x8x8xf32>
      %229 = vector.broadcast %218 : vector<4x8x1xf32> to vector<4x8x8xf32>
      %230 = arith.mulf %229, %228 : vector<4x8x8xf32>
      %231 = arith.truncf %221 : vector<4x8x8xf32> to vector<4x8x8xbf16>
      "tpu.trace_start"() <{level = 10 : i32, message = "hqk,hkd->hqd"}> : () -> ()
      %cst_123 = arith.constant dense<0.000000e+00> : vector<4x8x8xf32>
      %232 = tpu.matmul %231, %199, %cst_123 {dimension_numbers = #tpu.dot_dimension_numbers<[2], [1], [1], [2], [0, 0, 0, 1, 1, 2], [0], [0]>} : vector<4x8x8xbf16>, vector<4x8x8xbf16>, vector<4x8x8xf32> -> vector<4x8x8xf32>
      "tpu.trace_stop"() : () -> ()
      %233 = arith.addf %230, %232 : vector<4x8x8xf32>
      %c0_124 = arith.constant 0 : index
      %c0_125 = arith.constant 0 : index
      %c0_126 = arith.constant 0 : index
      %234 = vector.load %arg21[%c0_124, %c0_125, %c0_126] : memref<4x8x8xf32, #tpu.memory_space<vmem>>, vector<4x8x8xf32>
      tpu.vector_store %arg21[%c0_124, %c0_125, %c0_126], %233 {strides = array<i32>} : memref<4x8x8xf32, #tpu.memory_space<vmem>>, vector<4x8x8xf32>,
      %c0_127 = arith.constant 0 : index
      %c0_128 = arith.constant 0 : index
      %c0_129 = arith.constant 0 : index
      %235 = vector.load %arg19[%c0_127, %c0_128, %c0_129] : memref<4x8x1xf32, #tpu.memory_space<vmem>>, vector<4x8x1xf32>
      tpu.vector_store %arg19[%c0_127, %c0_128, %c0_129], %216 {strides = array<i32>} : memref<4x8x1xf32, #tpu.memory_space<vmem>>, vector<4x8x1xf32>,
    }
    %c0_58 = arith.constant 0 : index
    %c0_59 = arith.constant 0 : index
    %c0_60 = arith.constant 0 : index
    %115 = vector.load %arg21[%c0_58, %c0_59, %c0_60] : memref<4x8x8xf32, #tpu.memory_space<vmem>>, vector<4x8x8xf32>
    %c0_61 = arith.constant 0 : index
    %c0_62 = arith.constant 0 : index
    %c0_63 = arith.constant 0 : index
    %116 = vector.load %arg20[%c0_61, %c0_62, %c0_63] : memref<4x8x1xf32, #tpu.memory_space<vmem>>, vector<4x8x1xf32>
    %117 = tpu.reciprocal %116 {approx = true} : vector<4x8x1xf32> -> vector<4x8x1xf32>
    %118 = vector.broadcast %117 : vector<4x8x1xf32> to vector<4x8x8xf32>
    %119 = arith.mulf %115, %118 : vector<4x8x8xf32>
    %120 = vector.extract_strided_slice %119 {offsets = [0, 0, 0], sizes = [1, 8, 8], strides = [1, 1, 1]} : vector<4x8x8xf32> to vector<1x8x8xf32>
    %121 = vector.shape_cast %120 : vector<1x8x8xf32> to vector<8x8xf32>
    %c0_64 = arith.constant 0 : index
    %c0_65 = arith.constant 0 : index
    %122 = vector.load %arg22[%c0_64, %c0_65] : memref<8x32xf32, #tpu.memory_space<vmem>>, vector<8x8xf32>
    tpu.vector_store %arg22[%c0_64, %c0_65], %121 {strides = array<i32>} : memref<8x32xf32, #tpu.memory_space<vmem>>, vector<8x8xf32>,
    %123 = vector.extract_strided_slice %119 {offsets = [1, 0, 0], sizes = [1, 8, 8], strides = [1, 1, 1]} : vector<4x8x8xf32> to vector<1x8x8xf32>
    %124 = vector.shape_cast %123 : vector<1x8x8xf32> to vector<8x8xf32>
    %c0_66 = arith.constant 0 : index
    %c8 = arith.constant 8 : index
    %125 = vector.load %arg22[%c0_66, %c8] : memref<8x32xf32, #tpu.memory_space<vmem>>, vector<8x8xf32>
    tpu.vector_store %arg22[%c0_66, %c8], %124 {strides = array<i32>} : memref<8x32xf32, #tpu.memory_space<vmem>>, vector<8x8xf32>,
    %126 = vector.extract_strided_slice %119 {offsets = [2, 0, 0], sizes = [1, 8, 8], strides = [1, 1, 1]} : vector<4x8x8xf32> to vector<1x8x8xf32>
    %127 = vector.shape_cast %126 : vector<1x8x8xf32> to vector<8x8xf32>
    %c0_67 = arith.constant 0 : index
    %c16 = arith.constant 16 : index
    %128 = vector.load %arg22[%c0_67, %c16] : memref<8x32xf32, #tpu.memory_space<vmem>>, vector<8x8xf32>
    tpu.vector_store %arg22[%c0_67, %c16], %127 {strides = array<i32>} : memref<8x32xf32, #tpu.memory_space<vmem>>, vector<8x8xf32>,
    %129 = vector.extract_strided_slice %119 {offsets = [3, 0, 0], sizes = [1, 8, 8], strides = [1, 1, 1]} : vector<4x8x8xf32> to vector<1x8x8xf32>
    %130 = vector.shape_cast %129 : vector<1x8x8xf32> to vector<8x8xf32>
    %c0_68 = arith.constant 0 : index
    %c24 = arith.constant 24 : index
    %131 = vector.load %arg22[%c0_68, %c24] : memref<8x32xf32, #tpu.memory_space<vmem>>, vector<8x8xf32>
    tpu.vector_store %arg22[%c0_68, %c24], %130 {strides = array<i32>} : memref<8x32xf32, #tpu.memory_space<vmem>>, vector<8x8xf32>,
    %c0_69 = arith.constant 0 : index
    %c0_70 = arith.constant 0 : index
    %132 = vector.load %arg22[%c0_69, %c0_70] : memref<8x32xf32, #tpu.memory_space<vmem>>, vector<8x32xf32>
    %133 = arith.truncf %132 : vector<8x32xf32> to vector<8x32xbf16>
    %c0_71 = arith.constant 0 : index
    %c0_72 = arith.constant 0 : index
    %134 = vector.load %arg7[%c0_71, %c0_72] : memref<32x32xbf16, #tpu.memory_space<vmem>>, vector<32x32xbf16>
    %cst_73 = arith.constant dense<0.000000e+00> : vector<8x32xf32>
    %135 = tpu.matmul %133, %134, %cst_73 {dimension_numbers = #tpu.dot_dimension_numbers<[1], [0], [0], [1], [0, 0, 1, 1], [], []>} : vector<8x32xbf16>, vector<32x32xbf16>, vector<8x32xf32> -> vector<8x32xf32>
    %c0_74 = arith.constant 0 : index
    %c0_75 = arith.constant 0 : index
    %136 = vector.load %arg8[%c0_74, %c0_75] : memref<1x32xf32, #tpu.memory_space<vmem>>, vector<1x32xf32>
    %137 = vector.broadcast %136 : vector<1x32xf32> to vector<8x32xf32>
    %138 = arith.addf %135, %137 : vector<8x32xf32>
    %139 = arith.addf %3, %138 : vector<8x32xf32>
    %c0_76 = arith.constant 0 : index
    %c0_77 = arith.constant 0 : index
    %140 = vector.load %arg9[%c0_76, %c0_77] : memref<1x32xf32, #tpu.memory_space<vmem>>, vector<1x32xf32>
    %c0_78 = arith.constant 0 : index
    %c0_79 = arith.constant 0 : index
    %141 = vector.load %arg10[%c0_78, %c0_79] : memref<1x32xf32, #tpu.memory_space<vmem>>, vector<1x32xf32>
    %cst_80 = arith.constant dense<0.000000e+00> : vector<8xf32>
    %142 = vector.multi_reduction <add>, %139, %cst_80 [1] : vector<8x32xf32> to vector<8xf32>
    %143 = vector.shape_cast %142 : vector<8xf32> to vector<8x1xf32>
    %cst_81 = arith.constant 3.200000e+01 : f32
    %144 = vector.broadcast %cst_81 : f32 to vector<8x1xf32>
    %145 = arith.divf %143, %144 : vector<8x1xf32>
    %146 = vector.broadcast %145 : vector<8x1xf32> to vector<8x32xf32>
    %147 = arith.subf %139, %146 : vector<8x32xf32>
    %148 = arith.mulf %147, %147 : vector<8x32xf32>
    %cst_82 = arith.constant dense<0.000000e+00> : vector<8xf32>
    %149 = vector.multi_reduction <add>, %148, %cst_82 [1] : vector<8x32xf32> to vector<8xf32>
    %150 = vector.shape_cast %149 : vector<8xf32> to vector<8x1xf32>
    %cst_83 = arith.constant 3.200000e+01 : f32
    %151 = vector.broadcast %cst_83 : f32 to vector<8x1xf32>
    %152 = arith.divf %150, %151 : vector<8x1xf32>
    %153 = vector.broadcast %145 : vector<8x1xf32> to vector<8x32xf32>
    %154 = arith.subf %139, %153 : vector<8x32xf32>
    %cst_84 = arith.constant 9.99999974E-6 : f32
    %155 = vector.broadcast %cst_84 : f32 to vector<8x1xf32>
    %156 = arith.addf %152, %155 : vector<8x1xf32>
    %157 = math.sqrt %156 : vector<8x1xf32>
    %158 = vector.broadcast %157 : vector<8x1xf32> to vector<8x32xf32>
    %159 = arith.divf %154, %158 : vector<8x32xf32>
    %160 = vector.broadcast %140 : vector<1x32xf32> to vector<8x32xf32>
    %161 = arith.mulf %159, %160 : vector<8x32xf32>
    %162 = vector.broadcast %141 : vector<1x32xf32> to vector<8x32xf32>
    %163 = arith.addf %161, %162 : vector<8x32xf32>
    %164 = arith.truncf %163 : vector<8x32xf32> to vector<8x32xbf16>
    %c0_85 = arith.constant 0 : index
    %c0_86 = arith.constant 0 : index
    %165 = vector.load %arg11[%c0_85, %c0_86] : memref<32x128xbf16, #tpu.memory_space<vmem>>, vector<32x128xbf16>
    %cst_87 = arith.constant dense<0.000000e+00> : vector<8x128xf32>
    %166 = tpu.matmul %164, %165, %cst_87 {dimension_numbers = #tpu.dot_dimension_numbers<[1], [0], [0], [1], [0, 0, 1, 1], [], []>} : vector<8x32xbf16>, vector<32x128xbf16>, vector<8x128xf32> -> vector<8x128xf32>
    %c0_88 = arith.constant 0 : index
    %c0_89 = arith.constant 0 : index
    %167 = vector.load %arg12[%c0_88, %c0_89] : memref<1x128xf32, #tpu.memory_space<vmem>>, vector<1x128xf32>
    %168 = vector.broadcast %167 : vector<1x128xf32> to vector<8x128xf32>
    %169 = arith.addf %166, %168 : vector<8x128xf32>
    %cst_90 = arith.constant 0.636619746 : f32
    %170 = math.sqrt %cst_90 : f32
    %cst_91 = arith.constant 5.000000e-01 : f32
    %171 = vector.broadcast %cst_91 : f32 to vector<8x128xf32>
    %172 = arith.mulf %171, %169 : vector<8x128xf32>
    %cst_92 = arith.constant 4.471500e-02 : f32
    %173 = vector.broadcast %cst_92 : f32 to vector<8x128xf32>
    %174 = arith.mulf %173, %169 : vector<8x128xf32>
    %175 = arith.mulf %174, %169 : vector<8x128xf32>
    %176 = arith.mulf %175, %169 : vector<8x128xf32>
    %177 = arith.addf %169, %176 : vector<8x128xf32>
    %178 = vector.broadcast %170 : f32 to vector<8x128xf32>
    %179 = arith.mulf %178, %177 : vector<8x128xf32>
    %180 = math.tanh %179 : vector<8x128xf32>
    %cst_93 = arith.constant 1.000000e+00 : f32
    %181 = vector.broadcast %cst_93 : f32 to vector<8x128xf32>
    %182 = arith.addf %181, %180 : vector<8x128xf32>
    %183 = arith.mulf %172, %182 : vector<8x128xf32>
    %184 = arith.truncf %183 : vector<8x128xf32> to vector<8x128xbf16>
    %c0_94 = arith.constant 0 : index
    %c0_95 = arith.constant 0 : index
    %185 = vector.load %arg13[%c0_94, %c0_95] : memref<128x32xbf16, #tpu.memory_space<vmem>>, vector<128x32xbf16>
    %cst_96 = arith.constant dense<0.000000e+00> : vector<8x32xf32>
    %186 = tpu.matmul %184, %185, %cst_96 {dimension_numbers = #tpu.dot_dimension_numbers<[1], [0], [0], [1], [0, 0, 1, 1], [], []>} : vector<8x128xbf16>, vector<128x32xbf16>, vector<8x32xf32> -> vector<8x32xf32>
    %c0_97 = arith.constant 0 : index
    %c0_98 = arith.constant 0 : index
    %187 = vector.load %arg14[%c0_97, %c0_98] : memref<1x32xf32, #tpu.memory_space<vmem>>, vector<1x32xf32>
    %188 = vector.broadcast %187 : vector<1x32xf32> to vector<8x32xf32>
    %189 = arith.addf %186, %188 : vector<8x32xf32>
    %190 = arith.addf %139, %189 : vector<8x32xf32>
    %c0_99 = arith.constant 0 : index
    %c0_100 = arith.constant 0 : index
    %c0_101 = arith.constant 0 : index
    %191 = vector.load %arg15[%c0_99, %c0_100, %c0_101] : memref<1x8x32xf32, #tpu.memory_space<vmem>>, vector<1x8x32xf32>
    %192 = vector.shape_cast %191 : vector<1x8x32xf32> to vector<8x32xf32>
    %193 = vector.shape_cast %190 : vector<8x32xf32> to vector<1x8x32xf32>
    tpu.vector_store %arg15[%c0_99, %c0_100, %c0_101], %193 {strides = array<i32>} : memref<1x8x32xf32, #tpu.memory_space<vmem>>, vector<1x8x32xf32>,
    return
  }
  func.func @transform_0(%arg0: i32, %arg1: i32) -> (i32, i32, i32) {
    %c0_i32 = arith.constant 0 : i32
    %c0_i32_0 = arith.constant 0 : i32
    return %arg0, %arg1, %c0_i32 : i32, i32, i32
  }
  func.func @transform_1(%arg0: i32, %arg1: i32) -> (i32, i32) {
    %c0_i32 = arith.constant 0 : i32
    %c0_i32_0 = arith.constant 0 : i32
    %c0_i32_1 = arith.constant 0 : i32
    return %c0_i32, %c0_i32_0 : i32, i32
  }
  func.func @transform_2(%arg0: i32, %arg1: i32) -> (i32, i32) {
    %c0_i32 = arith.constant 0 : i32
    %c0_i32_0 = arith.constant 0 : i32
    %c0_i32_1 = arith.constant 0 : i32
    return %c0_i32, %c0_i32_0 : i32, i32
  }
  func.func @transform_3(%arg0: i32, %arg1: i32) -> (i32, i32) {
    %c0_i32 = arith.constant 0 : i32
    %c0_i32_0 = arith.constant 0 : i32
    %c0_i32_1 = arith.constant 0 : i32
    return %c0_i32, %c0_i32_0 : i32, i32
  }
  func.func @transform_4(%arg0: i32, %arg1: i32) -> (i32, i32) {
    %c0_i32 = arith.constant 0 : i32
    %c0_i32_0 = arith.constant 0 : i32
    %c0_i32_1 = arith.constant 0 : i32
    return %c0_i32, %c0_i32_0 : i32, i32
  }
  func.func @transform_5(%arg0: i32, %arg1: i32) -> (i32, i32) {
    %c0_i32 = arith.constant 0 : i32
    %c0_i32_0 = arith.constant 0 : i32
    %c0_i32_1 = arith.constant 0 : i32
    return %c0_i32, %c0_i32_0 : i32, i32
  }
  func.func @transform_6(%arg0: i32, %arg1: i32) -> (i32, i32) {
    %c0_i32 = arith.constant 0 : i32
    %c0_i32_0 = arith.constant 0 : i32
    %c0_i32_1 = arith.constant 0 : i32
    return %c0_i32, %c0_i32_0 : i32, i32
  }
  func.func @transform_7(%arg0: i32, %arg1: i32) -> (i32, i32) {
    %c0_i32 = arith.constant 0 : i32
    %c0_i32_0 = arith.constant 0 : i32
    %c0_i32_1 = arith.constant 0 : i32
    return %c0_i32, %c0_i32_0 : i32, i32
  }
  func.func @transform_8(%arg0: i32, %arg1: i32) -> (i32, i32) {
    %c0_i32 = arith.constant 0 : i32
    %c0_i32_0 = arith.constant 0 : i32
    %c0_i32_1 = arith.constant 0 : i32
    return %c0_i32, %c0_i32_0 : i32, i32
  }
  func.func @transform_9(%arg0: i32, %arg1: i32) -> (i32, i32) {
    %c0_i32 = arith.constant 0 : i32
    %c0_i32_0 = arith.constant 0 : i32
    %c0_i32_1 = arith.constant 0 : i32
    return %c0_i32, %c0_i32_0 : i32, i32
  }
  func.func @transform_10(%arg0: i32, %arg1: i32) -> (i32, i32) {
    %c0_i32 = arith.constant 0 : i32
    %c0_i32_0 = arith.constant 0 : i32
    %c0_i32_1 = arith.constant 0 : i32
    return %c0_i32, %c0_i32_0 : i32, i32
  }
  func.func @transform_11(%arg0: i32, %arg1: i32) -> (i32, i32) {
    %c0_i32 = arith.constant 0 : i32
    %c0_i32_0 = arith.constant 0 : i32
    %c0_i32_1 = arith.constant 0 : i32
    return %c0_i32, %c0_i32_0 : i32, i32
  }
  func.func @transform_12(%arg0: i32, %arg1: i32) -> (i32, i32) {
    %c0_i32 = arith.constant 0 : i32
    %c0_i32_0 = arith.constant 0 : i32
    %c0_i32_1 = arith.constant 0 : i32
    return %c0_i32, %c0_i32_0 : i32, i32
  }
  func.func @transform_13(%arg0: i32, %arg1: i32) -> (i32, i32, i32) {
    %c0_i32 = arith.constant 0 : i32
    %c0_i32_0 = arith.constant 0 : i32
    return %arg0, %arg1, %c0_i32 : i32, i32, i32
  }
}

</mosaic_0001>

<llo_original>
// kernel: tpu_custom_call.1
$region0: #{tpu_custom_call.1}
  #allocation0 [shape = 'u32[]', space=smem, size = 0x4, offset = 0x4, fixed_abs, tag = 'smem constant byte address 0x4 - core index']
  #allocation1 [shape = 'u32[72,128]{1,0:T(1,128)}', space=vmem, size = 0x9000, scoped, tag = 'internal scratch']
  #allocation2 [shape = 'bf16[4,16,8]{2,1,0:T(8,128)(2,1)}', space=vmem, size = 0x4000, scoped, tag = 'scratch operand']
  #allocation3 [shape = 'bf16[4,16,8]{2,1,0:T(8,128)(2,1)}', space=vmem, size = 0x4000, scoped, tag = 'scratch operand']
  #allocation4 [shape = 'bf16[4,8,8]{2,1,0:T(8,128)(2,1)}', space=vmem, size = 0x2000, scoped, tag = 'scratch operand']
  #allocation5 [shape = 'f32[4,8,1]{2,1,0:T(8,128)}', space=vmem, size = 0x4000, scoped, tag = 'scratch operand']
  #allocation6 [shape = 'f32[4,8,1]{2,1,0:T(8,128)}', space=vmem, size = 0x4000, scoped, tag = 'scratch operand']
  #allocation7 [shape = 'f32[4,8,8]{2,1,0:T(8,128)}', space=vmem, size = 0x4000, scoped, tag = 'scratch operand']
  #allocation8 [shape = 'f32[8,32]{1,0:T(8,128)}', space=vmem, size = 0x1000, scoped, tag = 'scratch operand']
  %s0 = inlined_call_operand.vmem [shape: f32[2,16,32], index: 0, kind: input, shape index: {}]
  %s1 = inlined_call_operand.hbm [shape: f32[1,32], index: 1, kind: input, shape index: {}]
  %s2 = inlined_call_operand.vmem [shape: f32[1,32], index: 2, kind: input, shape index: {}]
  %s3 = inlined_call_operand.vmem [shape: bf16[32,96], index: 3, kind: input, shape index: {}]
  %s4 = inlined_call_operand.vmem [shape: f32[1,96], index: 4, kind: input, shape index: {}]
  %s5 = inlined_call_operand.vmem [shape: bf16[32,32], index: 5, kind: input, shape index: {}]
  %s6 = inlined_call_operand.vmem [shape: f32[1,32], index: 6, kind: input, shape index: {}]
  %s7 = inlined_call_operand.vmem [shape: f32[1,32], index: 7, kind: input, shape index: {}]
  %s8 = inlined_call_operand.vmem [shape: f32[1,32], index: 8, kind: input, shape index: {}]
  %s9 = inlined_call_operand.vmem [shape: bf16[32,128], index: 9, kind: input, shape index: {}]
  %s10 = inlined_call_operand.vmem [shape: f32[1,128], index: 10, kind: input, shape index: {}]
  %s11 = inlined_call_operand.vmem [shape: bf16[128,32], index: 11, kind: input, shape index: {}]
  %s12 = inlined_call_operand.vmem [shape: f32[1,32], index: 12, kind: input, shape index: {}]
  %s13 = inlined_call_operand.hbm [shape: f32[2,16,32], index: 13, kind: output, shape index: {}]
  %s14 = sld [smem:[#allocation0]]
  $region96: #{tpu_custom_call.1} parent=0
    _
  %s16 = ssub.s32 1, %s14
  %s17 = scalar_select 0, %s16, %s14
  $region1: #{tpu_custom_call.1} parent=0
    #allocation9 [shape = 'u8[512]{0}', space=vmem, size = 0x400, scoped, tag = 'input window, operand 1, single buffered']
    #allocation10 [shape = 's32[2]{0}', space=sflag, size = 0x8, scoped, tag = 'scoped memory for tpu_custom_call.1']
    #allocation11 [shape = 's32[2]{0}', space=sflag, size = 0x8, scoped, tag = 'scoped memory for tpu_custom_call.1']
    #allocation12 [shape = 'u8[8192]{0}', space=vmem, size = 0x2000, scoped, tag = 'output window, operand 0']
    %18 = vsyncpa [#allocation10], 0
    %19 = vsyncpa [#allocation11], 0
    %s20 = scalar_lea.sflag [#allocation11], 1
    %21 = vsyncpa %s20, 0
    loop: start=0, step=1, limit=6
    $region2: #{tpu_custom_call.1} parent=1 // loop_pre_header
      _
    $region3: #{tpu_custom_call.1} parent=1 // loop_header
      %s23 = sphi 0, %s27
      %p24 = scmp.ge.s32.totalorder %s23, 6
      %s30 = sphi 0, %s42
      %s31 = sphi 0, %s38
      %s32 = sphi 0, %s30
      %s33 = sphi 0, %s31
      %s34 = sphi 0, %s32
      %s35 = sphi 0, %s33
      %s47 = sphi 0, %s49
      %s50 = sphi 0, %s47
      %s51 = sphi 0, %s50
      %s67 = sphi 0, %s51
      %s71 = sphi 0, %s71
      %s73 = sphi 0, %s71
      %s74 = sphi 0, %s73
      %s88 = sphi 0, %s74
      %s92 = sphi 0, %s92
      %s94 = sphi 0, %s92
      %s95 = sphi 0, %s94
      %s109 = sphi 0, %s95
      %s113 = sphi 0, %s113
      %s115 = sphi 0, %s113
      %s116 = sphi 0, %s115
      %s130 = sphi 0, %s116
      %s134 = sphi 0, %s134
      %s136 = sphi 0, %s134
      %s137 = sphi 0, %s136
      %s151 = sphi 0, %s137
      %s155 = sphi 0, %s155
      %s157 = sphi 0, %s155
      %s158 = sphi 0, %s157
      %s172 = sphi 0, %s158
      %s176 = sphi 0, %s176
      %s178 = sphi 0, %s176
      %s179 = sphi 0, %s178
      %s193 = sphi 0, %s179
      %s197 = sphi 0, %s197
      %s199 = sphi 0, %s197
      %s200 = sphi 0, %s199
      %s214 = sphi 0, %s200
      %s218 = sphi 0, %s218
      %s220 = sphi 0, %s218
      %s221 = sphi 0, %s220
      %s235 = sphi 0, %s221
      %s239 = sphi 0, %s239
      %s241 = sphi 0, %s239
      %s242 = sphi 0, %s241
      %s256 = sphi 0, %s242
      %s260 = sphi 0, %s260
      %s262 = sphi 0, %s260
      %s263 = sphi 0, %s262
      %s277 = sphi 0, %s263
      %s281 = sphi 0, %s281
      %s283 = sphi 0, %s281
      %s284 = sphi 0, %s283
      %s298 = sphi 0, %s284
      %s302 = sphi 0, %s302
      %s304 = sphi 0, %s302
      %s305 = sphi 0, %s304
      %s319 = sphi 0, %s305
      %s327 = sphi 0, %s329
      %s330 = sphi 0, %s327
      %s331 = sphi 0, %s330
      %s347 = sphi 0, %s331
    $region4: #{tpu_custom_call.1} parent=1 // loop_header_branch
      %26 = sbr.rel (%p24) target = $region8
    $region5: #{tpu_custom_call.1} parent=1 // loop_body
      %s28 = ssub.s32 %s23, 1
      %s29 = ssub.s32 %s23, 2
      %s36 = sadd.s32 1, %s31
      %p37 = scmp.ge.s32.totalorder %s36, 2
      %s38 = scalar_select %p37, 0, %s36
      %s39 = sadd.s32 1, %s30
      %s40 = scalar_select %p37, %s39, %s30
      %p41 = scmp.ge.s32.totalorder %s40, 2
      %s42 = scalar_select %p41, 0, %s40
      %s43 = ssub.s32 %s30, %s42
      %s44 = ssub.s32 %s31, %s38
      %s45 = sor.u32 %s43, %s44
      %p46 = scmp.eq.s32.totalorder %s45, 0
      %s48 = sadd.s32 %s47, 1
      %s49 = scalar_select %p46, %s47, %s48
      %p52 = pneg %p46
      %p53 = scmp.eq.s32.totalorder %s23, 3
      %p54 = por %p52, %p53
      %p55 = scmp.ne.s32.totalorder %s47, %s50
      %p56 = scmp.eq.s32.totalorder %s23, 0
      %p57 = por %p55, %p56
      %p58 = scmp.ne.s32.totalorder %s47, %s50
      %p59 = scmp.eq.s32.totalorder %s28, 3
      %p60 = por %p58, %p59
      %p61 = scmp.ne.s32.totalorder %s50, %s51
      %p62 = scmp.eq.s32.totalorder %s28, 0
      %p63 = por %p61, %p62
      %p64 = scmp.ne.s32.totalorder %s50, %s51
      %p65 = scmp.eq.s32.totalorder %s29, 3
      %p66 = por %p64, %p65
      %p68 = scmp.ne.s32.totalorder %s51, %s67
      %p69 = scmp.eq.s32.totalorder %s29, 0
      %p70 = por %p68, %p69
      %s72 = sadd.s32 %s71, 1
      %p75 = scmp.eq.s32.totalorder %s23, 3
      %p76 = scmp.ne.s32.totalorder %s71, %s73
      %p77 = scmp.eq.s32.totalorder %s23, 0
      %p78 = por %p76, %p77
      %p79 = scmp.ne.s32.totalorder %s71, %s73
      %p80 = scmp.eq.s32.totalorder %s28, 3
      %p81 = por %p79, %p80
      %p82 = scmp.ne.s32.totalorder %s73, %s74
      %p83 = scmp.eq.s32.totalorder %s28, 0
      %p84 = por %p82, %p83
      %p85 = scmp.ne.s32.totalorder %s73, %s74
      %p86 = scmp.eq.s32.totalorder %s29, 3
      %p87 = por %p85, %p86
      %p89 = scmp.ne.s32.totalorder %s74, %s88
      %p90 = scmp.eq.s32.totalorder %s29, 0
      %p91 = por %p89, %p90
      %s93 = sadd.s32 %s92, 1
      %p96 = scmp.eq.s32.totalorder %s23, 3
      %p97 = scmp.ne.s32.totalorder %s92, %s94
      %p98 = scmp.eq.s32.totalorder %s23, 0
      %p99 = por %p97, %p98
      %p100 = scmp.ne.s32.totalorder %s92, %s94
      %p101 = scmp.eq.s32.totalorder %s28, 3
      %p102 = por %p100, %p101
      %p103 = scmp.ne.s32.totalorder %s94, %s95
      %p104 = scmp.eq.s32.totalorder %s28, 0
      %p105 = por %p103, %p104
      %p106 = scmp.ne.s32.totalorder %s94, %s95
      %p107 = scmp.eq.s32.totalorder %s29, 3
      %p108 = por %p106, %p107
      %p110 = scmp.ne.s32.totalorder %s95, %s109
      %p111 = scmp.eq.s32.totalorder %s29, 0
      %p112 = por %p110, %p111
      %s114 = sadd.s32 %s113, 1
      %p117 = scmp.eq.s32.totalorder %s23, 3
      %p118 = scmp.ne.s32.totalorder %s113, %s115
      %p119 = scmp.eq.s32.totalorder %s23, 0
      %p120 = por %p118, %p119
      %p121 = scmp.ne.s32.totalorder %s113, %s115
      %p122 = scmp.eq.s32.totalorder %s28, 3
      %p123 = por %p121, %p122
      %p124 = scmp.ne.s32.totalorder %s115, %s116
      %p125 = scmp.eq.s32.totalorder %s28, 0
      %p126 = por %p124, %p125
      %p127 = scmp.ne.s32.totalorder %s115, %s116
      %p128 = scmp.eq.s32.totalorder %s29, 3
      %p129 = por %p127, %p128
      %p131 = scmp.ne.s32.totalorder %s116, %s130
      %p132 = scmp.eq.s32.totalorder %s29, 0
      %p133 = por %p131, %p132
      %s135 = sadd.s32 %s134, 1
      %p138 = scmp.eq.s32.totalorder %s23, 3
      %p139 = scmp.ne.s32.totalorder %s134, %s136
      %p140 = scmp.eq.s32.totalorder %s23, 0
      %p141 = por %p139, %p140
      %p142 = scmp.ne.s32.totalorder %s134, %s136
      %p143 = scmp.eq.s32.totalorder %s28, 3
      %p144 = por %p142, %p143
      %p145 = scmp.ne.s32.totalorder %s136, %s137
      %p146 = scmp.eq.s32.totalorder %s28, 0
      %p147 = por %p145, %p146
      %p148 = scmp.ne.s32.totalorder %s136, %s137
      %p149 = scmp.eq.s32.totalorder %s29, 3
      %p150 = por %p148, %p149
      %p152 = scmp.ne.s32.totalorder %s137, %s151
      %p153 = scmp.eq.s32.totalorder %s29, 0
      %p154 = por %p152, %p153
      %s156 = sadd.s32 %s155, 1
      %p159 = scmp.eq.s32.totalorder %s23, 3
      %p160 = scmp.ne.s32.totalorder %s155, %s157
      %p161 = scmp.eq.s32.totalorder %s23, 0
      %p162 = por %p160, %p161
      %p163 = scmp.ne.s32.totalorder %s155, %s157
      %p164 = scmp.eq.s32.totalorder %s28, 3
      %p165 = por %p163, %p164
      %p166 = scmp.ne.s32.totalorder %s157, %s158
      %p167 = scmp.eq.s32.totalorder %s28, 0
      %p168 = por %p166, %p167
      %p169 = scmp.ne.s32.totalorder %s157, %s158
      %p170 = scmp.eq.s32.totalorder %s29, 3
      %p171 = por %p169, %p170
      %p173 = scmp.ne.s32.totalorder %s158, %s172
      %p174 = scmp.eq.s32.totalorder %s29, 0
      %p175 = por %p173, %p174
      %s177 = sadd.s32 %s176, 1
      %p180 = scmp.eq.s32.totalorder %s23, 3
      %p181 = scmp.ne.s32.totalorder %s176, %s178
      %p182 = scmp.eq.s32.totalorder %s23, 0
      %p183 = por %p181, %p182
      %p184 = scmp.ne.s32.totalorder %s176, %s178
      %p185 = scmp.eq.s32.totalorder %s28, 3
      %p186 = por %p184, %p185
      %p187 = scmp.ne.s32.totalorder %s178, %s179
      %p188 = scmp.eq.s32.totalorder %s28, 0
      %p189 = por %p187, %p188
      %p190 = scmp.ne.s32.totalorder %s178, %s179
      %p191 = scmp.eq.s32.totalorder %s29, 3
      %p192 = por %p190, %p191
      %p194 = scmp.ne.s32.totalorder %s179, %s193
      %p195 = scmp.eq.s32.totalorder %s29, 0
      %p196 = por %p194, %p195
      %s198 = sadd.s32 %s197, 1
      %p201 = scmp.eq.s32.totalorder %s23, 3
      %p202 = scmp.ne.s32.totalorder %s197, %s199
      %p203 = scmp.eq.s32.totalorder %s23, 0
      %p204 = por %p202, %p203
      %p205 = scmp.ne.s32.totalorder %s197, %s199
      %p206 = scmp.eq.s32.totalorder %s28, 3
      %p207 = por %p205, %p206
      %p208 = scmp.ne.s32.totalorder %s199, %s200
      %p209 = scmp.eq.s32.totalorder %s28, 0
      %p210 = por %p208, %p209
      %p211 = scmp.ne.s32.totalorder %s199, %s200
      %p212 = scmp.eq.s32.totalorder %s29, 3
      %p213 = por %p211, %p212
      %p215 = scmp.ne.s32.totalorder %s200, %s214
      %p216 = scmp.eq.s32.totalorder %s29, 0
      %p217 = por %p215, %p216
      %s219 = sadd.s32 %s218, 1
      %p222 = scmp.eq.s32.totalorder %s23, 3
      %p223 = scmp.ne.s32.totalorder %s218, %s220
      %p224 = scmp.eq.s32.totalorder %s23, 0
      %p225 = por %p223, %p224
      %p226 = scmp.ne.s32.totalorder %s218, %s220
      %p227 = scmp.eq.s32.totalorder %s28, 3
      %p228 = por %p226, %p227
      %p229 = scmp.ne.s32.totalorder %s220, %s221
      %p230 = scmp.eq.s32.totalorder %s28, 0
      %p231 = por %p229, %p230
      %p232 = scmp.ne.s32.totalorder %s220, %s221
      %p233 = scmp.eq.s32.totalorder %s29, 3
      %p234 = por %p232, %p233
      %p236 = scmp.ne.s32.totalorder %s221, %s235
      %p237 = scmp.eq.s32.totalorder %s29, 0
      %p238 = por %p236, %p237
      %s240 = sadd.s32 %s239, 1
      %p243 = scmp.eq.s32.totalorder %s23, 3
      %p244 = scmp.ne.s32.totalorder %s239, %s241
      %p245 = scmp.eq.s32.totalorder %s23, 0
      %p246 = por %p244, %p245
      %p247 = scmp.ne.s32.totalorder %s239, %s241
      %p248 = scmp.eq.s32.totalorder %s28, 3
      %p249 = por %p247, %p248
      %p250 = scmp.ne.s32.totalorder %s241, %s242
      %p251 = scmp.eq.s32.totalorder %s28, 0
      %p252 = por %p250, %p251
      %p253 = scmp.ne.s32.totalorder %s241, %s242
      %p254 = scmp.eq.s32.totalorder %s29, 3
      %p255 = por %p253, %p254
      %p257 = scmp.ne.s32.totalorder %s242, %s256
      %p258 = scmp.eq.s32.totalorder %s29, 0
      %p259 = por %p257, %p258
      %s261 = sadd.s32 %s260, 1
      %p264 = scmp.eq.s32.totalorder %s23, 3
      %p265 = scmp.ne.s32.totalorder %s260, %s262
      %p266 = scmp.eq.s32.totalorder %s23, 0
      %p267 = por %p265, %p266
      %p268 = scmp.ne.s32.totalorder %s260, %s262
      %p269 = scmp.eq.s32.totalorder %s28, 3
      %p270 = por %p268, %p269
      %p271 = scmp.ne.s32.totalorder %s262, %s263
      %p272 = scmp.eq.s32.totalorder %s28, 0
      %p273 = por %p271, %p272
      %p274 = scmp.ne.s32.totalorder %s262, %s263
      %p275 = scmp.eq.s32.totalorder %s29, 3
      %p276 = por %p274, %p275
      %p278 = scmp.ne.s32.totalorder %s263, %s277
      %p279 = scmp.eq.s32.totalorder %s29, 0
      %p280 = por %p278, %p279
      %s282 = sadd.s32 %s281, 1
      %p285 = scmp.eq.s32.totalorder %s23, 3
      %p286 = scmp.ne.s32.totalorder %s281, %s283
      %p287 = scmp.eq.s32.totalorder %s23, 0
      %p288 = por %p286, %p287
      %p289 = scmp.ne.s32.totalorder %s281, %s283
      %p290 = scmp.eq.s32.totalorder %s28, 3
      %p291 = por %p289, %p290
      %p292 = scmp.ne.s32.totalorder %s283, %s284
      %p293 = scmp.eq.s32.totalorder %s28, 0
      %p294 = por %p292, %p293
      %p295 = scmp.ne.s32.totalorder %s283, %s284
      %p296 = scmp.eq.s32.totalorder %s29, 3
      %p297 = por %p295, %p296
      %p299 = scmp.ne.s32.totalorder %s284, %s298
      %p300 = scmp.eq.s32.totalorder %s29, 0
      %p301 = por %p299, %p300
      %s303 = sadd.s32 %s302, 1
      %p306 = scmp.eq.s32.totalorder %s23, 3
      %p307 = scmp.ne.s32.totalorder %s302, %s304
      %p308 = scmp.eq.s32.totalorder %s23, 0
      %p309 = por %p307, %p308
      %p310 = scmp.ne.s32.totalorder %s302, %s304
      %p311 = scmp.eq.s32.totalorder %s28, 3
      %p312 = por %p310, %p311
      %p313 = scmp.ne.s32.totalorder %s304, %s305
      %p314 = scmp.eq.s32.totalorder %s28, 0
      %p315 = por %p313, %p314
      %p316 = scmp.ne.s32.totalorder %s304, %s305
      %p317 = scmp.eq.s32.totalorder %s29, 3
      %p318 = por %p316, %p317
      %p320 = scmp.ne.s32.totalorder %s305, %s319
      %p321 = scmp.eq.s32.totalorder %s29, 0
      %p322 = por %p320, %p321
      %s323 = ssub.s32 %s30, %s42
      %s324 = ssub.s32 %s31, %s38
      %s325 = sor.u32 %s323, %s324
      %p326 = scmp.eq.s32.totalorder %s325, 0
      %s328 = sadd.s32 %s327, 1
      %s329 = scalar_select %p326, %s327, %s328
      %p332 = pneg %p326
      %p333 = scmp.eq.s32.totalorder %s23, 3
      %p334 = por %p332, %p333
      %p335 = scmp.ne.s32.totalorder %s327, %s330
      %p336 = scmp.eq.s32.totalorder %s23, 0
      %p337 = por %p335, %p336
      %p338 = scmp.ne.s32.totalorder %s327, %s330
      %p339 = scmp.eq.s32.totalorder %s28, 3
      %p340 = por %p338, %p339
      %p341 = scmp.ne.s32.totalorder %s330, %s331
      %p342 = scmp.eq.s32.totalorder %s28, 0
      %p343 = por %p341, %p342
      %p344 = scmp.ne.s32.totalorder %s330, %s331
      %p345 = scmp.eq.s32.totalorder %s29, 3
      %p346 = por %p344, %p345
      %p348 = scmp.ne.s32.totalorder %s331, %s347
      %p349 = scmp.eq.s32.totalorder %s29, 0
      %p350 = por %p348, %p349
      %p351 = scmp.le.s32.totalorder 1, %s23
      %p352 = scmp.lt.s32.totalorder %s23, 5
      %p353 = pnand %p351, %p352
      %p354 = pneg %p353
      // Predicated region
      $region9: #{tpu_custom_call.1} parent=5 // pred_check
        _
      $region10: #{tpu_custom_call.1} parent=5 // pred_check_branch
        %356 = sbr.rel (%p353) target = $region12
      $region11: #{tpu_custom_call.1} parent=5 // pred_region
        %s357 = ssub.s32 %s23, 1
        // Predicated region
        $region13: #{tpu_custom_call.1} parent=11 // pred_check
          %p358 = pneg %p84
        $region14: #{tpu_custom_call.1} parent=11 // pred_check_branch
          %360 = sbr.rel (%p358) target = $region16
        $region15: #{tpu_custom_call.1} parent=11 // pred_region
          %362 = vsyncadd [#allocation10], 0
          %s364 = sshll.u32 %s1, 4
          %s365 = int_to_ptr.hbm [resolvable:$true] %s364
          %s366 = sshll.u32 [#allocation9], 4
          %s367 = int_to_ptr.vmem [resolvable:$true] %s366
          %369 = dma.hbm_to_vmem [thread:$0]  %s365, 16, %s367, [#allocation10]
        $region16: #{tpu_custom_call.1} parent=11 // pred_fallthru
          _
        // Predicated region
        $region17: #{tpu_custom_call.1} parent=11 // pred_check
          %p370 = pneg %p105
        $region18: #{tpu_custom_call.1} parent=11 // pred_check_branch
          %372 = sbr.rel (%p370) target = $region20
        $region19: #{tpu_custom_call.1} parent=11 // pred_region
          _
        $region20: #{tpu_custom_call.1} parent=11 // pred_fallthru
          _
        // Predicated region
        $region21: #{tpu_custom_call.1} parent=11 // pred_check
          %p373 = pneg %p126
        $region22: #{tpu_custom_call.1} parent=11 // pred_check_branch
          %375 = sbr.rel (%p373) target = $region24
        $region23: #{tpu_custom_call.1} parent=11 // pred_region
          _
        $region24: #{tpu_custom_call.1} parent=11 // pred_fallthru
          _
        // Predicated region
        $region25: #{tpu_custom_call.1} parent=11 // pred_check
          %p376 = pneg %p147
        $region26: #{tpu_custom_call.1} parent=11 // pred_check_branch
          %378 = sbr.rel (%p376) target = $region28
        $region27: #{tpu_custom_call.1} parent=11 // pred_region
          _
        $region28: #{tpu_custom_call.1} parent=11 // pred_fallthru
          _
        // Predicated region
        $region29: #{tpu_custom_call.1} parent=11 // pred_check
          %p379 = pneg %p168
        $region30: #{tpu_custom_call.1} parent=11 // pred_check_branch
          %381 = sbr.rel (%p379) target = $region32
        $region31: #{tpu_custom_call.1} parent=11 // pred_region
          _
        $region32: #{tpu_custom_call.1} parent=11 // pred_fallthru
          _
        // Predicated region
        $region33: #{tpu_custom_call.1} parent=11 // pred_check
          %p382 = pneg %p189
        $region34: #{tpu_custom_call.1} parent=11 // pred_check_branch
          %384 = sbr.rel (%p382) target = $region36
        $region35: #{tpu_custom_call.1} parent=11 // pred_region
          _
        $region36: #{tpu_custom_call.1} parent=11 // pred_fallthru
          _
        // Predicated region
        $region37: #{tpu_custom_call.1} parent=11 // pred_check
          %p385 = pneg %p210
        $region38: #{tpu_custom_call.1} parent=11 // pred_check_branch
          %387 = sbr.rel (%p385) target = $region40
        $region39: #{tpu_custom_call.1} parent=11 // pred_region
          _
        $region40: #{tpu_custom_call.1} parent=11 // pred_fallthru
          _
        // Predicated region
        $region41: #{tpu_custom_call.1} parent=11 // pred_check
          %p388 = pneg %p231
        $region42: #{tpu_custom_call.1} parent=11 // pred_check_branch
          %390 = sbr.rel (%p388) target = $region44
        $region43: #{tpu_custom_call.1} parent=11 // pred_region
          _
        $region44: #{tpu_custom_call.1} parent=11 // pred_fallthru
          _
        // Predicated region
        $region45: #{tpu_custom_call.1} parent=11 // pred_check
          %p391 = pneg %p252
        $region46: #{tpu_custom_call.1} parent=11 // pred_check_branch
          %393 = sbr.rel (%p391) target = $region48
        $region47: #{tpu_custom_call.1} parent=11 // pred_region
          _
        $region48: #{tpu_custom_call.1} parent=11 // pred_fallthru
          _
        // Predicated region
        $region49: #{tpu_custom_call.1} parent=11 // pred_check
          %p394 = pneg %p273
        $region50: #{tpu_custom_call.1} parent=11 // pred_check_branch
          %396 = sbr.rel (%p394) target = $region52
        $region51: #{tpu_custom_call.1} parent=11 // pred_region
          _
        $region52: #{tpu_custom_call.1} parent=11 // pred_fallthru
          _
        // Predicated region
        $region53: #{tpu_custom_call.1} parent=11 // pred_check
          %p397 = pneg %p294
        $region54: #{tpu_custom_call.1} parent=11 // pred_check_branch
          %399 = sbr.rel (%p397) target = $region56
        $region55: #{tpu_custom_call.1} parent=11 // pred_region
          _
        $region56: #{tpu_custom_call.1} parent=11 // pred_fallthru
          _
        // Predicated region
        $region57: #{tpu_custom_call.1} parent=11 // pred_check
          %p400 = pneg %p315
        $region58: #{tpu_custom_call.1} parent=11 // pred_check_branch
          %402 = sbr.rel (%p400) target = $region60
        $region59: #{tpu_custom_call.1} parent=11 // pred_region
          _
        $region60: #{tpu_custom_call.1} parent=11 // pred_fallthru
          _
      $region12: #{tpu_custom_call.1} parent=5 // pred_fallthru
        _
      %p403 = scmp.lt.s32.totalorder %s23, 4
      // Predicated region
      $region61: #{tpu_custom_call.1} parent=5 // pred_check
        %p404 = pneg %p403
      $region62: #{tpu_custom_call.1} parent=5 // pred_check_branch
        %406 = sbr.rel (%p404) target = $region64
      $region63: #{tpu_custom_call.1} parent=5 // pred_region
        // Predicated region
        $region65: #{tpu_custom_call.1} parent=63 // pred_check
          %p407 = pneg %p57
        $region66: #{tpu_custom_call.1} parent=63 // pred_check_branch
          %409 = sbr.rel (%p407) target = $region68
        $region67: #{tpu_custom_call.1} parent=63 // pred_region
          %p410 = scmp.lt.s32.totalorder %s30, 1
          %s411 = scalar_select %p410, %s30, 1
          %p412 = scmp.lt.s32.totalorder %s31, 1
          %s413 = scalar_select %p412, %s31, 1
          %s414 = smul.addr %s411, 2
          %s415 = sadd.s32 %s413, %s414
          %s416 = smul.addr %s415, 8
          %s417 = scalar_lea.vmem %s0, %s416
        $region68: #{tpu_custom_call.1} parent=63 // pred_fallthru
          _
      $region64: #{tpu_custom_call.1} parent=5 // pred_fallthru
        _
      %p418 = scmp.le.s32.totalorder 1, %s23
      %p419 = scmp.lt.s32.totalorder %s23, 5
      %p420 = pnand %p418, %p419
      %p421 = pneg %p420
      // Predicated region
      $region69: #{tpu_custom_call.1} parent=5 // pred_check
        _
      $region70: #{tpu_custom_call.1} parent=5 // pred_check_branch
        %423 = sbr.rel (%p420) target = $region72
      $region71: #{tpu_custom_call.1} parent=5 // pred_region
        %s424 = ssub.s32 %s23, 1
        // Predicated region
        $region73: #{tpu_custom_call.1} parent=71 // pred_check
          %p425 = pneg %p84
        $region74: #{tpu_custom_call.1} parent=71 // pred_check_branch
          %427 = sbr.rel (%p425) target = $region76
        $region75: #{tpu_custom_call.1} parent=71 // pred_region
          %429 = dma.done [#allocation10], 16
        $region76: #{tpu_custom_call.1} parent=71 // pred_fallthru
          _
        %p430 = scmp.lt.s32.totalorder %s32, 1
        %s431 = scalar_select %p430, %s32, 1
        %p432 = scmp.lt.s32.totalorder %s33, 1
        %s433 = scalar_select %p432, %s33, 1
        %s434 = smul.addr %s431, 2
        %s435 = sadd.s32 %s433, %s434
        %s436 = smul.addr %s435, 8
        %s437 = scalar_lea.vmem %s0, %s436
        %p438 = pneg %p63
        %p439 = pneg %p60
        %p440 = pneg %p84
        %p441 = pneg %p81
        %p442 = pneg %p105
        %p443 = pneg %p102
        %p444 = pneg %p126
        %p445 = pneg %p123
        %p446 = pneg %p147
        %p447 = pneg %p144
        %p448 = pneg %p168
        %p449 = pneg %p165
        %p450 = pneg %p189
        %p451 = pneg %p186
        %p452 = pneg %p210
        %p453 = pneg %p207
        %p454 = pneg %p231
        %p455 = pneg %p228
        %p456 = pneg %p252
        %p457 = pneg %p249
        %p458 = pneg %p273
        %p459 = pneg %p270
        %p460 = pneg %p294
        %p461 = pneg %p291
        %p462 = pneg %p315
        %p463 = pneg %p312
        %p464 = pneg %p343
        %p465 = pneg %p340
        %s466 = sand.u32 %s330, 1
        %s467 = scalar_lea.sflag [#allocation11], %s466
        %s468 = sand.u32 %s330, 1
        %s469 = smul.addr %s468, 8
        %s470 = scalar_lea.vmem [#allocation12], %s469
        %p471 = scmp.lt.s32.totalorder %s32, 1
        %s472 = scalar_select %p471, %s32, 1
        %p473 = scmp.lt.s32.totalorder %s33, 1
        %s474 = scalar_select %p473, %s33, 1
        %s475 = smul.addr %s472, 2
        %s476 = sadd.s32 %s474, %s475
        %s477 = smul.addr %s476, 8
        %s478 = scalar_lea.vmem %s0, %s477
        %s480 = smul.u32 %s33, 8
        %v481 = vld [vmem:[%s478] sm:$0xff]
        %v482 = vld [vmem:[#allocation9] sm:$0x1]
        %v483 = vld [vmem:[%s2] sm:$0x1]
        %vm484 = vcmask 261120
        %v485 = vsel %vm484, %v481, 0.0
        %486 = vadd.xlane.f32.xlu0 %v485
        %v487 = vpop.xlane.xlu0 %486
        %v488 = vrcp.pop 32.0
        %v489 = vmul.f32 32.0, %v488
        %v490 = vsub.f32 1.0, %v489
        %v491 = vmul.f32 %v488, %v490
        %v492 = vadd.f32 %v488, %v491
        %vm493 = vweird.f32 %v488
        %v494 = vsel %vm493, %v488, %v492
        %v495 = vmul.f32 %v487, %v494
        %v496 = vsub.f32 %v481, %v495
        %v497 = vmul.f32 %v496, %v496
        %v498 = vsel %vm484, %v497, 0.0
        %499 = vadd.xlane.f32.xlu0 %v498
        %v500 = vpop.xlane.xlu0 %499
        %v501 = vmul.f32 %v500, %v494
        %v502 = vadd.f32 %v501, 1e-05
        %v503 = vrsqrt.pop %v502
        %v504 = vmul.f32 %v503, %v502
        %v505 = vmul.f32 %v504, %v503
        %v506 = vmul.f32 0.5, %v505
        %v507 = vsub.f32 1.5, %v506
        %v508 = vmul.f32 %v503, %v507
        %v509 = vmul.f32 %v502, %v508
        %vm510 = vcmp.eq.f32.partialorder %v502, inf
        %v511 = vsel %vm510, %v502, %v509
        %vm512 = vcmp.eq.f32.partialorder %v502, 0.0
        %v513 = vand.u32 %v502, 2147483648
        %v514 = vsel %vm512, %v513, %v511
        %v515 = vrcp.pop %v514
        %v516 = vmul.f32 %v514, %v515
        %v517 = vsub.f32 1.0, %v516
        %v518 = vmul.f32 %v515, %v517
        %v519 = vadd.f32 %v515, %v518
        %vm520 = vweird.f32 %v514
        %vm521 = vweird.f32 %v515
        %vm522 = vmor %vm520, %vm521
        %v523 = vsel %vm522, %v515, %v519
        %v524 = vand.u32 2147483647, %v514
        %vm525 = vcmp.eq.f32.partialorder %v524, 8.507059e+37
        %v526 = vand.u32 %v514, 2147483648
        %v527 = vor.u32 1.1754944e-38, %v526
        %v528 = vsel %vm525, %v527, %v523
        %v529 = vmul.f32 %v496, %v528
        %v531 = vperm.slane %v482, 0
        %v533 = vmul.f32 %v529, %v531
        %v535 = vperm.slane %v483, 0
        %v537 = vadd.f32 %v533, %v535
        %v538 = vpack.c.bf16 %v537, %v537
        %v539 = vld [vmem:[%s3] sm:$0xf]
        %v540 = vld [vmem:[%s3 + $0x4] sm:$0xf]
        %v541 = vld [vmem:[%s3 + $0x8] sm:$0xf]
        %v542 = vld [vmem:[%s3 + $0xc] sm:$0xf]
        %v543 = vld [vmem:[%s4] sm:$0x1]
        %v545 = vperm.slane %v543, 0
        %v551 = vunpack.c.l.b16 %v539
        %v552 = vunpack.c.l.b16 %v540
        %v553 = vunpack.c.l.b16 %v541
        %v554 = vunpack.c.l.b16 %v542
        %v555 = vpack.c.b16 %v552, %v551
        %v556 = vpack.c.b16 %v554, %v553
        %v560 = vsel %vm484, %v538, 0
        %562 = vmatpush.bf16.msra.mxu0 0
        %563 = vmatpush.bf16.msra.mxu0 0
        %564 = vmatpush.bf16.msra.mxu0 0
        %565 = vmatpush.bf16.msra.mxu0 0
        %566 = vmatpush.bf16.msra.mxu0 0
        %567 = vmatpush.bf16.msra.mxu0 0
        %568 = vmatpush.bf16.msra.mxu0 %v556
        %569 = vmatpush.bf16.msra.mxu0 %v555
        %570 = vmatmul.bf16.gmra.mxu0 %v560
        %v571 = vpop.f32.mrf.mxu0
        %v572 = vadd.f32 %v545, %v571
        %v573 = vpop.f32.mrf.mxu0
        %574 = vdwg.mxu0
        %v575 = vmul.f32 %v572, 0.35355338
        %v576 = vpack.c.bf16 %v575, %v575
        %vm577 = vcmask 60416
        %578 = vst.msk [vmem:[#allocation4] sm:$0xf] %vm577, %v576
        %v579 = vpack.c.bf16 %v572, %v572
        %581 = vrot.lane.b32.xlu0 %v579, 96
        %v582 = vpop.permute.xlu0 %581
        %s584 = sshra.s32 %s480, 3
        %s585 = sand.u32 %s480, 7
        %s586 = smul.addr %s584, 4
        %s587 = scalar_lea.vmem [#allocation2], %s586
        %588 = vst.msk [vmem:[%s587] sm:$0xf] %vm577, %v582
        %589 = vrot.lane.b32.xlu0 %v579, 64
        %v590 = vpop.permute.xlu0 %589
        %s592 = smul.addr %s584, 4
        %s593 = scalar_lea.vmem [#allocation3], %s592
        %594 = vst.msk [vmem:[%s593] sm:$0xf] %vm577, %v590
        %596 = vrot.lane.b32.xlu0 %v576, 120
        %v597 = vpop.permute.xlu0 %596
        %s599 = scalar_lea.vmem [#allocation4], 4
        %600 = vst.msk [vmem:[%s599] sm:$0xf] %vm577, %v597
        %601 = vrot.lane.b32.xlu0 %v579, 88
        %v602 = vpop.permute.xlu0 %601
        %s604 = sadd.s32 %s584, 2
        %s605 = smul.addr %s604, 4
        %s606 = scalar_lea.vmem [#allocation2], %s605
        %607 = vst.msk [vmem:[%s606] sm:$0xf] %vm577, %v602
        %608 = vrot.lane.b32.xlu0 %v579, 56
        %v609 = vpop.permute.xlu0 %608
        %s611 = smul.addr %s604, 4
        %s612 = scalar_lea.vmem [#allocation3], %s611
        %613 = vst.msk [vmem:[%s612] sm:$0xf] %vm577, %v609
        %614 = vrot.lane.b32.xlu0 %v576, 112
        %v615 = vpop.permute.xlu0 %614
        %s617 = scalar_lea.vmem [#allocation4], 8
        %618 = vst.msk [vmem:[%s617] sm:$0xf] %vm577, %v615
        %619 = vrot.lane.b32.xlu0 %v579, 80
        %v620 = vpop.permute.xlu0 %619
        %s622 = sadd.s32 %s584, 4
        %s623 = smul.addr %s622, 4
        %s624 = scalar_lea.vmem [#allocation2], %s623
        %625 = vst.msk [vmem:[%s624] sm:$0xf] %vm577, %v620
        %626 = vrot.lane.b32.xlu0 %v579, 48
        %v627 = vpop.permute.xlu0 %626
        %s629 = smul.addr %s622, 4
        %s630 = scalar_lea.vmem [#allocation3], %s629
        %631 = vst.msk [vmem:[%s630] sm:$0xf] %vm577, %v627
        %632 = vrot.lane.b32.xlu0 %v576, 104
        %v633 = vpop.permute.xlu0 %632
        %s635 = scalar_lea.vmem [#allocation4], 12
        %636 = vst.msk [vmem:[%s635] sm:$0xf] %vm577, %v633
        %637 = vrot.lane.b32.xlu0 %v579, 72
        %v638 = vpop.permute.xlu0 %637
        %s640 = sadd.s32 %s584, 6
        %s641 = smul.addr %s640, 4
        %s642 = scalar_lea.vmem [#allocation2], %s641
        %643 = vst.msk [vmem:[%s642] sm:$0xf] %vm577, %v638
        %644 = vrot.lane.b32.xlu0 %v579, 40
        %v645 = vpop.permute.xlu0 %644
        %s647 = smul.addr %s640, 4
        %s648 = scalar_lea.vmem [#allocation3], %s647
        %649 = vst.msk [vmem:[%s648] sm:$0xf] %vm577, %v645
        %v650 = vld [vmem:[#allocation4] sm:$0xf]
        %v651 = vld [vmem:[#allocation4 + $0x4] sm:$0xf]
        %v652 = vld [vmem:[#allocation4 + $0x8] sm:$0xf]
        %v653 = vld [vmem:[#allocation4 + $0xc] sm:$0xf]
        %vm654 = vcmask 7168
        %655 = vst.msk [vmem:[#allocation5] sm:$0xff] %vm654, -1e+30
        %656 = vst.msk [vmem:[#allocation5 + $0x8] sm:$0xff] %vm654, -1e+30
        %657 = vst.msk [vmem:[#allocation5 + $0x10] sm:$0xff] %vm654, -1e+30
        %658 = vst.msk [vmem:[#allocation5 + $0x18] sm:$0xff] %vm654, -1e+30
        %659 = vst.msk [vmem:[#allocation6] sm:$0xff] %vm654, 0.0
        %660 = vst.msk [vmem:[#allocation6 + $0x8] sm:$0xff] %vm654, 0.0
        %661 = vst.msk [vmem:[#allocation6 + $0x10] sm:$0xff] %vm654, 0.0
        %662 = vst.msk [vmem:[#allocation6 + $0x18] sm:$0xff] %vm654, 0.0
        %vm663 = vcmask 64512
        %664 = vst.msk [vmem:[#allocation7] sm:$0xff] %vm663, 0.0
        %665 = vst.msk [vmem:[#allocation7 + $0x8] sm:$0xff] %vm663, 0.0
        %666 = vst.msk [vmem:[#allocation7 + $0x10] sm:$0xff] %vm663, 0.0
        %667 = vst.msk [vmem:[#allocation7 + $0x18] sm:$0xff] %vm663, 0.0
        %s668 = sadd.s32 %s33, 1
        // While loop
        $region77: #{tpu_custom_call.1} parent=71 // loop_pre_header
          _
        $region78: #{tpu_custom_call.1} parent=71 // loop_header
          %s670 = sphi 0, %s672
          %p671 = scmp.ge.s32.totalorder %s670, %s668
        $region79: #{tpu_custom_call.1} parent=71 // loop_header_branch
          %674 = sbr.rel (%p671) target = $region83
        $region80: #{tpu_custom_call.1} parent=71 // loop_body
          %s675 = smul.u32 %s670, 8
          %s676 = sshra.s32 %s675, 3
          %s677 = sand.u32 %s675, 7
          %s678 = smul.addr %s676, 4
          %s679 = scalar_lea.vmem [#allocation2], %s678
          %v680 = vld [vmem:[%s679] sm:$0xf]
          %v681 = vld [vmem:[%s679 + $0x8] sm:$0xf]
          %v682 = vld [vmem:[%s679 + $0x10] sm:$0xf]
          %v683 = vld [vmem:[%s679 + $0x18] sm:$0xf]
          %s684 = smul.addr %s676, 4
          %s685 = scalar_lea.vmem [#allocation3], %s684
          %v686 = vld [vmem:[%s685] sm:$0xf]
          %v687 = vld [vmem:[%s685 + $0x8] sm:$0xf]
          %v688 = vld [vmem:[%s685 + $0x10] sm:$0xf]
          %v689 = vld [vmem:[%s685 + $0x18] sm:$0xf]
          %v691 = vsel %vm663, %v650, 0
          %v694 = vsel %vm663, %v680, 0
          %696 = vmatpush.bf16.xpose.msra.mxu0 0
          %697 = vmatpush.bf16.xpose.msra.mxu0 0
          %698 = vmatpush.bf16.xpose.msra.mxu0 0
          %699 = vmatpush.bf16.xpose.msra.mxu0 0
          %700 = vmatpush.bf16.xpose.msra.mxu0 0
          %701 = vmatpush.bf16.xpose.msra.mxu0 0
          %702 = vmatpush.bf16.xpose.msra.mxu0 0
          %703 = vmatpush.bf16.xpose.msra.mxu0 %v694
          %704 = vmatmul.bf16.gmra.mxu0 %v691
          %v705 = vpop.f32.mrf.mxu0
          %v706 = vadd.f32 0.0, %v705
          %v707 = vpop.f32.mrf.mxu0
          %708 = vdwg.mxu0
          %v710 = vsel %vm663, %v651, 0
          %v713 = vsel %vm663, %v681, 0
          %715 = vmatpush.bf16.xpose.msra.mxu0 0
          %716 = vmatpush.bf16.xpose.msra.mxu0 0
          %717 = vmatpush.bf16.xpose.msra.mxu0 0
          %718 = vmatpush.bf16.xpose.msra.mxu0 0
          %719 = vmatpush.bf16.xpose.msra.mxu0 0
          %720 = vmatpush.bf16.xpose.msra.mxu0 0
          %721 = vmatpush.bf16.xpose.msra.mxu0 0
          %722 = vmatpush.bf16.xpose.msra.mxu0 %v713
          %723 = vmatmul.bf16.gmra.mxu0 %v710
          %v724 = vpop.f32.mrf.mxu0
          %v725 = vadd.f32 0.0, %v724
          %v726 = vpop.f32.mrf.mxu0
          %727 = vdwg.mxu0
          %v729 = vsel %vm663, %v652, 0
          %v732 = vsel %vm663, %v682, 0
          %734 = vmatpush.bf16.xpose.msra.mxu0 0
          %735 = vmatpush.bf16.xpose.msra.mxu0 0
          %736 = vmatpush.bf16.xpose.msra.mxu0 0
          %737 = vmatpush.bf16.xpose.msra.mxu0 0
          %738 = vmatpush.bf16.xpose.msra.mxu0 0
          %739 = vmatpush.bf16.xpose.msra.mxu0 0
          %740 = vmatpush.bf16.xpose.msra.mxu0 0
          %741 = vmatpush.bf16.xpose.msra.mxu0 %v732
          %742 = vmatmul.bf16.gmra.mxu0 %v729
          %v743 = vpop.f32.mrf.mxu0
          %v744 = vadd.f32 0.0, %v743
          %v745 = vpop.f32.mrf.mxu0
          %746 = vdwg.mxu0
          %v748 = vsel %vm663, %v653, 0
          %v751 = vsel %vm663, %v683, 0
          %753 = vmatpush.bf16.xpose.msra.mxu0 0
          %754 = vmatpush.bf16.xpose.msra.mxu0 0
          %755 = vmatpush.bf16.xpose.msra.mxu0 0
          %756 = vmatpush.bf16.xpose.msra.mxu0 0
          %757 = vmatpush.bf16.xpose.msra.mxu0 0
          %758 = vmatpush.bf16.xpose.msra.mxu0 0
          %759 = vmatpush.bf16.xpose.msra.mxu0 0
          %760 = vmatpush.bf16.xpose.msra.mxu0 %v751
          %761 = vmatmul.bf16.gmra.mxu0 %v748
          %v762 = vpop.f32.mrf.mxu0
          %v763 = vadd.f32 0.0, %v762
          %v764 = vpop.f32.mrf.mxu0
          %765 = vdwg.mxu0
          %v766 = vlaneseq
          %v767 = vshrl.u32 %v766, 7
          %v768 = vstv %s480
          %v769 = vadd.s32 %v768, %v767
          %v770 = vlaneseq
          %v771 = vand.u32 %v770, 127
          %v772 = vstv %s675
          %v773 = vadd.s32 %v772, %v771
          %vm774 = vcmp.ge.s32.totalorder %v769, %v773
          %v775 = vsel %vm774, 1, 0
          %vm776 = vcmp.eq.s32.totalorder %v775, 1
          %v777 = vsel %vm776, %v706, -1e+30
          %v778 = vsel %vm776, %v725, -1e+30
          %v779 = vsel %vm776, %v744, -1e+30
          %v780 = vsel %vm776, %v763, -1e+30
          %v781 = vld [vmem:[#allocation5] sm:$0xff]
          %v782 = vld [vmem:[#allocation5 + $0x8] sm:$0xff]
          %v783 = vld [vmem:[#allocation5 + $0x10] sm:$0xff]
          %v784 = vld [vmem:[#allocation5 + $0x18] sm:$0xff]
          %v785 = vsel %vm663, %v777, -inf
          %786 = vmax.xlane.f32.xlu0 %v785
          %v787 = vpop.xlane.xlu0 %786
          %v788 = vsel %vm663, %v778, -inf
          %789 = vmax.xlane.f32.xlu0 %v788
          %v790 = vpop.xlane.xlu0 %789
          %v791 = vsel %vm663, %v779, -inf
          %792 = vmax.xlane.f32.xlu0 %v791
          %v793 = vpop.xlane.xlu0 %792
          %v794 = vsel %vm663, %v780, -inf
          %795 = vmax.xlane.f32.xlu0 %v794
          %v796 = vpop.xlane.xlu0 %795
          %v797 = vmax.f32 %v781, %v787
          %v798 = vmax.f32 %v782, %v790
          %v799 = vmax.f32 %v783, %v793
          %v800 = vmax.f32 %v784, %v796
          %v801 = vsub.f32 %v781, %v797
          %v802 = vsub.f32 %v782, %v798
          %v803 = vsub.f32 %v783, %v799
          %v804 = vsub.f32 %v784, %v800
          %v805 = vmul.f32 %v801, 1.442695
          %v806 = vpow.pop %v805
          %v807 = vmul.f32 %v802, 1.442695
          %v808 = vpow.pop %v807
          %v809 = vmul.f32 %v803, 1.442695
          %v810 = vpow.pop %v809
          %v811 = vmul.f32 %v804, 1.442695
          %v812 = vpow.pop %v811
          %814 = vset.pattern.permute.xlu0 0
          %815 = vperm.xlu0 %814, %v797
          %v816 = vpop.permute.xlu0 %815
          %819 = vset.pattern.permute.xlu0 0
          %820 = vperm.xlu0 %819, %v798
          %v821 = vpop.permute.xlu0 %820
          %824 = vset.pattern.permute.xlu0 0
          %825 = vperm.xlu0 %824, %v799
          %v826 = vpop.permute.xlu0 %825
          %829 = vset.pattern.permute.xlu0 0
          %830 = vperm.xlu0 %829, %v800
          %v831 = vpop.permute.xlu0 %830
          %v833 = vsub.f32 %v777, %v816
          %v834 = vsub.f32 %v778, %v821
          %v835 = vsub.f32 %v779, %v826
          %v836 = vsub.f32 %v780, %v831
          %v837 = vmul.f32 %v833, 1.442695
          %v838 = vpow.pop %v837
          %v839 = vmul.f32 %v834, 1.442695
          %v840 = vpow.pop %v839
          %v841 = vmul.f32 %v835, 1.442695
          %v842 = vpow.pop %v841
          %v843 = vmul.f32 %v836, 1.442695
          %v844 = vpow.pop %v843
          %v845 = vld [vmem:[#allocation6] sm:$0xff]
          %v846 = vld [vmem:[#allocation6 + $0x8] sm:$0xff]
          %v847 = vld [vmem:[#allocation6 + $0x10] sm:$0xff]
          %v848 = vld [vmem:[#allocation6 + $0x18] sm:$0xff]
          %v849 = vmul.f32 %v806, %v845
          %v850 = vmul.f32 %v808, %v846
          %v851 = vmul.f32 %v810, %v847
          %v852 = vmul.f32 %v812, %v848
          %v853 = vsel %vm663, %v838, 0.0
          %854 = vadd.xlane.f32.xlu0 %v853
          %v855 = vpop.xlane.xlu0 %854
          %v856 = vsel %vm663, %v840, 0.0
          %857 = vadd.xlane.f32.xlu0 %v856
          %v858 = vpop.xlane.xlu0 %857
          %v859 = vsel %vm663, %v842, 0.0
          %860 = vadd.xlane.f32.xlu0 %v859
          %v861 = vpop.xlane.xlu0 %860
          %v862 = vsel %vm663, %v844, 0.0
          %863 = vadd.xlane.f32.xlu0 %v862
          %v864 = vpop.xlane.xlu0 %863
          %v865 = vadd.f32 %v849, %v855
          %v866 = vadd.f32 %v850, %v858
          %v867 = vadd.f32 %v851, %v861
          %v868 = vadd.f32 %v852, %v864
          %869 = vst.msk [vmem:[#allocation6] sm:$0xff] %vm654, %v865
          %870 = vst.msk [vmem:[#allocation6 + $0x8] sm:$0xff] %vm654, %v866
          %871 = vst.msk [vmem:[#allocation6 + $0x10] sm:$0xff] %vm654, %v867
          %872 = vst.msk [vmem:[#allocation6 + $0x18] sm:$0xff] %vm654, %v868
          %v873 = vld [vmem:[#allocation7] sm:$0xff]
          %v874 = vld [vmem:[#allocation7 + $0x8] sm:$0xff]
          %v875 = vld [vmem:[#allocation7 + $0x10] sm:$0xff]
          %v876 = vld [vmem:[#allocation7 + $0x18] sm:$0xff]
          %878 = vset.pattern.permute.xlu0 0
          %879 = vperm.xlu0 %878, %v806
          %v880 = vpop.permute.xlu0 %879
          %883 = vset.pattern.permute.xlu0 0
          %884 = vperm.xlu0 %883, %v808
          %v885 = vpop.permute.xlu0 %884
          %888 = vset.pattern.permute.xlu0 0
          %889 = vperm.xlu0 %888, %v810
          %v890 = vpop.permute.xlu0 %889
          %893 = vset.pattern.permute.xlu0 0
          %894 = vperm.xlu0 %893, %v812
          %v895 = vpop.permute.xlu0 %894
          %v897 = vmul.f32 %v880, %v873
          %v898 = vmul.f32 %v885, %v874
          %v899 = vmul.f32 %v890, %v875
          %v900 = vmul.f32 %v895, %v876
          %v901 = vpack.c.bf16 %v838, %v838
          %v902 = vpack.c.bf16 %v840, %v840
          %v903 = vpack.c.bf16 %v842, %v842
          %v904 = vpack.c.bf16 %v844, %v844
          %v906 = vsel %vm663, %v901, 0
          %vm908 = vcmask 1043456
          %v910 = vsel %vm908, %v686, 0
          %912 = vmatpush.bf16.msra.mxu0 0
          %913 = vmatpush.bf16.msra.mxu0 0
          %914 = vmatpush.bf16.msra.mxu0 0
          %915 = vmatpush.bf16.msra.mxu0 0
          %916 = vmatpush.bf16.msra.mxu0 0
          %917 = vmatpush.bf16.msra.mxu0 0
          %918 = vmatpush.bf16.msra.mxu0 0
          %919 = vmatpush.bf16.msra.mxu0 %v910
          %920 = vmatmul.bf16.gmra.mxu0 %v906
          %v921 = vpop.f32.mrf.mxu0
          %v922 = vadd.f32 0.0, %v921
          %v923 = vpop.f32.mrf.mxu0
          %924 = vdwg.mxu0
          %v926 = vsel %vm663, %v902, 0
          %v929 = vsel %vm908, %v687, 0
          %931 = vmatpush.bf16.msra.mxu0 0
          %932 = vmatpush.bf16.msra.mxu0 0
          %933 = vmatpush.bf16.msra.mxu0 0
          %934 = vmatpush.bf16.msra.mxu0 0
          %935 = vmatpush.bf16.msra.mxu0 0
          %936 = vmatpush.bf16.msra.mxu0 0
          %937 = vmatpush.bf16.msra.mxu0 0
          %938 = vmatpush.bf16.msra.mxu0 %v929
          %939 = vmatmul.bf16.gmra.mxu0 %v926
          %v940 = vpop.f32.mrf.mxu0
          %v941 = vadd.f32 0.0, %v940
          %v942 = vpop.f32.mrf.mxu0
          %943 = vdwg.mxu0
          %v945 = vsel %vm663, %v903, 0
          %v948 = vsel %vm908, %v688, 0
          %950 = vmatpush.bf16.msra.mxu0 0
          %951 = vmatpush.bf16.msra.mxu0 0
          %952 = vmatpush.bf16.msra.mxu0 0
          %953 = vmatpush.bf16.msra.mxu0 0
          %954 = vmatpush.bf16.msra.mxu0 0
          %955 = vmatpush.bf16.msra.mxu0 0
          %956 = vmatpush.bf16.msra.mxu0 0
          %957 = vmatpush.bf16.msra.mxu0 %v948
          %958 = vmatmul.bf16.gmra.mxu0 %v945
          %v959 = vpop.f32.mrf.mxu0
          %v960 = vadd.f32 0.0, %v959
          %v961 = vpop.f32.mrf.mxu0
          %962 = vdwg.mxu0
          %v964 = vsel %vm663, %v904, 0
          %v967 = vsel %vm908, %v689, 0
          %969 = vmatpush.bf16.msra.mxu0 0
          %970 = vmatpush.bf16.msra.mxu0 0
          %971 = vmatpush.bf16.msra.mxu0 0
          %972 = vmatpush.bf16.msra.mxu0 0
          %973 = vmatpush.bf16.msra.mxu0 0
          %974 = vmatpush.bf16.msra.mxu0 0
          %975 = vmatpush.bf16.msra.mxu0 0
          %976 = vmatpush.bf16.msra.mxu0 %v967
          %977 = vmatmul.bf16.gmra.mxu0 %v964
          %v978 = vpop.f32.mrf.mxu0
          %v979 = vadd.f32 0.0, %v978
          %v980 = vpop.f32.mrf.mxu0
          %981 = vdwg.mxu0
          %v982 = vadd.f32 %v897, %v922
          %v983 = vadd.f32 %v898, %v941
          %v984 = vadd.f32 %v899, %v960
          %v985 = vadd.f32 %v900, %v979
          %986 = vst.msk [vmem:[#allocation7] sm:$0xff] %vm663, %v982
          %987 = vst.msk [vmem:[#allocation7 + $0x8] sm:$0xff] %vm663, %v983
          %988 = vst.msk [vmem:[#allocation7 + $0x10] sm:$0xff] %vm663, %v984
          %989 = vst.msk [vmem:[#allocation7 + $0x18] sm:$0xff] %vm663, %v985
          %990 = vst.msk [vmem:[#allocation5] sm:$0xff] %vm654, %v797
          %991 = vst.msk [vmem:[#allocation5 + $0x8] sm:$0xff] %vm654, %v798
          %992 = vst.msk [vmem:[#allocation5 + $0x10] sm:$0xff] %vm654, %v799
          %993 = vst.msk [vmem:[#allocation5 + $0x18] sm:$0xff] %vm654, %v800
        $region81: #{tpu_custom_call.1} parent=71 // loop_footer
          %s672 = sadd.s32 %s670, 1
        $region82: #{tpu_custom_call.1} parent=71 // loop_footer_branch
          %669 = sbr.rel target = $region78
        $region83: #{tpu_custom_call.1} parent=71 // loop_exit
          _
        %v994 = vld [vmem:[#allocation7] sm:$0xff]
        %v995 = vld [vmem:[#allocation7 + $0x8] sm:$0xff]
        %v996 = vld [vmem:[#allocation7 + $0x10] sm:$0xff]
        %v997 = vld [vmem:[#allocation7 + $0x18] sm:$0xff]
        %v998 = vld [vmem:[#allocation6] sm:$0xff]
        %v999 = vld [vmem:[#allocation6 + $0x8] sm:$0xff]
        %v1000 = vld [vmem:[#allocation6 + $0x10] sm:$0xff]
        %v1001 = vld [vmem:[#allocation6 + $0x18] sm:$0xff]
        %v1002 = vrcp.pop %v998
        %v1003 = vrcp.pop %v999
        %v1004 = vrcp.pop %v1000
        %v1005 = vrcp.pop %v1001
        %1007 = vset.pattern.permute.xlu0 0
        %1008 = vperm.xlu0 %1007, %v1002
        %v1009 = vpop.permute.xlu0 %1008
        %1012 = vset.pattern.permute.xlu0 0
        %1013 = vperm.xlu0 %1012, %v1003
        %v1014 = vpop.permute.xlu0 %1013
        %1017 = vset.pattern.permute.xlu0 0
        %1018 = vperm.xlu0 %1017, %v1004
        %v1019 = vpop.permute.xlu0 %1018
        %1022 = vset.pattern.permute.xlu0 0
        %1023 = vperm.xlu0 %1022, %v1005
        %v1024 = vpop.permute.xlu0 %1023
        %v1026 = vmul.f32 %v994, %v1009
        %v1027 = vmul.f32 %v995, %v1014
        %v1028 = vmul.f32 %v996, %v1019
        %v1029 = vmul.f32 %v997, %v1024
        %1030 = vst.msk [vmem:[#allocation8] sm:$0xff] %vm663, %v1026
        %1032 = vrot.lane.b32.xlu0 %v1027, 8
        %v1033 = vpop.permute.xlu0 %1032
        %vm1035 = vcmask 130112
        %1036 = vst.msk [vmem:[#allocation8] sm:$0xff] %vm1035, %v1033
        %1038 = vrot.lane.b32.xlu0 %v1028, 16
        %v1039 = vpop.permute.xlu0 %1038
        %vm1041 = vcmask 195712
        %1042 = vst.msk [vmem:[#allocation8] sm:$0xff] %vm1041, %v1039
        %1044 = vrot.lane.b32.xlu0 %v1029, 24
        %v1045 = vpop.permute.xlu0 %1044
        %vm1047 = vcmask 261312
        %1048 = vst.msk [vmem:[#allocation8] sm:$0xff] %vm1047, %v1045
        %v1049 = vld [vmem:[#allocation8] sm:$0xff]
        %v1050 = vpack.c.bf16 %v1049, %v1049
        %v1051 = vld [vmem:[%s5] sm:$0xf]
        %v1052 = vld [vmem:[%s5 + $0x4] sm:$0xf]
        %v1053 = vld [vmem:[%s5 + $0x8] sm:$0xf]
        %v1054 = vld [vmem:[%s5 + $0xc] sm:$0xf]
        %v1055 = vld [vmem:[%s6] sm:$0x1]
        %v1057 = vperm.slane %v1055, 0
        %v1063 = vunpack.c.l.b16 %v1051
        %v1064 = vunpack.c.l.b16 %v1052
        %v1065 = vunpack.c.l.b16 %v1053
        %v1066 = vunpack.c.l.b16 %v1054
        %v1067 = vpack.c.b16 %v1064, %v1063
        %v1068 = vpack.c.b16 %v1066, %v1065
        %v1072 = vsel %vm484, %v1050, 0
        %1074 = vmatpush.bf16.msra.mxu0 0
        %1075 = vmatpush.bf16.msra.mxu0 0
        %1076 = vmatpush.bf16.msra.mxu0 0
        %1077 = vmatpush.bf16.msra.mxu0 0
        %1078 = vmatpush.bf16.msra.mxu0 0
        %1079 = vmatpush.bf16.msra.mxu0 0
        %1080 = vmatpush.bf16.msra.mxu0 %v1068
        %1081 = vmatpush.bf16.msra.mxu0 %v1067
        %1082 = vmatmul.bf16.gmra.mxu0 %v1072
        %v1083 = vpop.f32.mrf.mxu0
        %v1084 = vadd.f32 %v1057, %v1083
        %v1085 = vpop.f32.mrf.mxu0
        %1086 = vdwg.mxu0
        %v1087 = vadd.f32 %v481, %v1084
        %v1088 = vld [vmem:[%s7] sm:$0x1]
        %v1089 = vld [vmem:[%s8] sm:$0x1]
        %v1090 = vsel %vm484, %v1087, 0.0
        %1091 = vadd.xlane.f32.xlu0 %v1090
        %v1092 = vpop.xlane.xlu0 %1091
        %v1093 = vmul.f32 %v1092, %v494
        %v1094 = vsub.f32 %v1087, %v1093
        %v1095 = vmul.f32 %v1094, %v1094
        %v1096 = vsel %vm484, %v1095, 0.0
        %1097 = vadd.xlane.f32.xlu0 %v1096
        %v1098 = vpop.xlane.xlu0 %1097
        %v1099 = vmul.f32 %v1098, %v494
        %v1100 = vadd.f32 %v1099, 1e-05
        %v1101 = vrsqrt.pop %v1100
        %v1102 = vmul.f32 %v1101, %v1100
        %v1103 = vmul.f32 %v1102, %v1101
        %v1104 = vmul.f32 0.5, %v1103
        %v1105 = vsub.f32 1.5, %v1104
        %v1106 = vmul.f32 %v1101, %v1105
        %v1107 = vmul.f32 %v1100, %v1106
        %vm1108 = vcmp.eq.f32.partialorder %v1100, inf
        %v1109 = vsel %vm1108, %v1100, %v1107
        %vm1110 = vcmp.eq.f32.partialorder %v1100, 0.0
        %v1111 = vand.u32 %v1100, 2147483648
        %v1112 = vsel %vm1110, %v1111, %v1109
        %v1113 = vrcp.pop %v1112
        %v1114 = vmul.f32 %v1112, %v1113
        %v1115 = vsub.f32 1.0, %v1114
        %v1116 = vmul.f32 %v1113, %v1115
        %v1117 = vadd.f32 %v1113, %v1116
        %vm1118 = vweird.f32 %v1112
        %vm1119 = vweird.f32 %v1113
        %vm1120 = vmor %vm1118, %vm1119
        %v1121 = vsel %vm1120, %v1113, %v1117
        %v1122 = vand.u32 2147483647, %v1112
        %vm1123 = vcmp.eq.f32.partialorder %v1122, 8.507059e+37
        %v1124 = vand.u32 %v1112, 2147483648
        %v1125 = vor.u32 1.1754944e-38, %v1124
        %v1126 = vsel %vm1123, %v1125, %v1121
        %v1127 = vmul.f32 %v1094, %v1126
        %v1129 = vperm.slane %v1088, 0
        %v1131 = vmul.f32 %v1127, %v1129
        %v1133 = vperm.slane %v1089, 0
        %v1135 = vadd.f32 %v1131, %v1133
        %v1136 = vpack.c.bf16 %v1135, %v1135
        %v1137 = vld [vmem:[%s9] sm:$0xf]
        %v1138 = vld [vmem:[%s9 + $0x4] sm:$0xf]
        %v1139 = vld [vmem:[%s9 + $0x8] sm:$0xf]
        %v1140 = vld [vmem:[%s9 + $0xc] sm:$0xf]
        %v1141 = vld [vmem:[%s10] sm:$0x1]
        %v1143 = vperm.slane %v1141, 0
        %v1149 = vunpack.c.l.b16 %v1137
        %v1150 = vunpack.c.l.b16 %v1138
        %v1151 = vunpack.c.l.b16 %v1139
        %v1152 = vunpack.c.l.b16 %v1140
        %v1153 = vpack.c.b16 %v1150, %v1149
        %v1154 = vpack.c.b16 %v1152, %v1151
        %v1158 = vsel %vm484, %v1136, 0
        %1160 = vmatpush.bf16.msra.mxu0 0
        %1161 = vmatpush.bf16.msra.mxu0 0
        %1162 = vmatpush.bf16.msra.mxu0 0
        %1163 = vmatpush.bf16.msra.mxu0 0
        %1164 = vmatpush.bf16.msra.mxu0 0
        %1165 = vmatpush.bf16.msra.mxu0 0
        %1166 = vmatpush.bf16.msra.mxu0 %v1154
        %1167 = vmatpush.bf16.msra.mxu0 %v1153
        %1168 = vmatmul.bf16.gmra.mxu0 %v1158
        %v1169 = vpop.f32.mrf.mxu0
        %v1170 = vadd.f32 %v1143, %v1169
        %v1171 = vpop.f32.mrf.mxu0
        %1172 = vdwg.mxu0
        %v1173 = vmul.f32 %v1170, 0.5
        %v1174 = vmul.f32 %v1170, 0.044715
        %v1175 = vmul.f32 %v1174, %v1170
        %v1176 = vmul.f32 %v1175, %v1170
        %v1177 = vadd.f32 %v1170, %v1176
        %v1178 = vmul.f32 %v1177, 0.7978845
        %v1179 = vtanh.pop %v1178
        %v1180 = vadd.f32 %v1179, 1.0
        %v1181 = vmul.f32 %v1173, %v1180
        %v1182 = vpack.c.bf16 %v1181, %v1181
        %v1183 = vld [vmem:[%s11] sm:$0xf]
        %v1184 = vld [vmem:[%s11 + $0x4] sm:$0xf]
        %v1185 = vld [vmem:[%s11 + $0x8] sm:$0xf]
        %v1186 = vld [vmem:[%s11 + $0xc] sm:$0xf]
        %v1187 = vld [vmem:[%s11 + $0x10] sm:$0xf]
        %v1188 = vld [vmem:[%s11 + $0x14] sm:$0xf]
        %v1189 = vld [vmem:[%s11 + $0x18] sm:$0xf]
        %v1190 = vld [vmem:[%s11 + $0x1c] sm:$0xf]
        %v1191 = vld [vmem:[%s11 + $0x20] sm:$0xf]
        %v1192 = vld [vmem:[%s11 + $0x24] sm:$0xf]
        %v1193 = vld [vmem:[%s11 + $0x28] sm:$0xf]
        %v1194 = vld [vmem:[%s11 + $0x2c] sm:$0xf]
        %v1195 = vld [vmem:[%s11 + $0x30] sm:$0xf]
        %v1196 = vld [vmem:[%s11 + $0x34] sm:$0xf]
        %v1197 = vld [vmem:[%s11 + $0x38] sm:$0xf]
        %v1198 = vld [vmem:[%s11 + $0x3c] sm:$0xf]
        %v1199 = vld [vmem:[%s12] sm:$0x1]
        %v1201 = vperm.slane %v1199, 0
        %v1219 = vunpack.c.l.b16 %v1183
        %v1220 = vunpack.c.l.b16 %v1184
        %v1221 = vunpack.c.l.b16 %v1185
        %v1222 = vunpack.c.l.b16 %v1186
        %v1223 = vunpack.c.l.b16 %v1187
        %v1224 = vunpack.c.l.b16 %v1188
        %v1225 = vunpack.c.l.b16 %v1189
        %v1226 = vunpack.c.l.b16 %v1190
        %v1227 = vunpack.c.l.b16 %v1191
        %v1228 = vunpack.c.l.b16 %v1192
        %v1229 = vunpack.c.l.b16 %v1193
        %v1230 = vunpack.c.l.b16 %v1194
        %v1231 = vunpack.c.l.b16 %v1195
        %v1232 = vunpack.c.l.b16 %v1196
        %v1233 = vunpack.c.l.b16 %v1197
        %v1234 = vunpack.c.l.b16 %v1198
        %v1235 = vpack.c.b16 %v1220, %v1219
        %v1236 = vpack.c.b16 %v1222, %v1221
        %v1237 = vpack.c.b16 %v1224, %v1223
        %v1238 = vpack.c.b16 %v1226, %v1225
        %v1239 = vpack.c.b16 %v1228, %v1227
        %v1240 = vpack.c.b16 %v1230, %v1229
        %v1241 = vpack.c.b16 %v1232, %v1231
        %v1242 = vpack.c.b16 %v1234, %v1233
        %1251 = vmatpush.bf16.msra.mxu0 %v1242
        %1252 = vmatpush.bf16.msra.mxu0 %v1241
        %1253 = vmatpush.bf16.msra.mxu0 %v1240
        %1254 = vmatpush.bf16.msra.mxu0 %v1239
        %1255 = vmatpush.bf16.msra.mxu0 %v1238
        %1256 = vmatpush.bf16.msra.mxu0 %v1237
        %1257 = vmatpush.bf16.msra.mxu0 %v1236
        %1258 = vmatpush.bf16.msra.mxu0 %v1235
        %1259 = vmatmul.bf16.gmra.mxu0 %v1182
        %v1260 = vpop.f32.mrf.mxu0
        %v1261 = vadd.f32 %v1201, %v1260
        %v1262 = vpop.f32.mrf.mxu0
        %1263 = vdwg.mxu0
        %v1264 = vadd.f32 %v1087, %v1261
        %1265 = vst.msk [vmem:[%s470] sm:$0xff] %vm484, %v1264
        %s1266 = sand.u32 %s330, 1
        %s1267 = scalar_lea.sflag [#allocation11], %s1266
        %s1268 = sand.u32 %s330, 1
        %s1269 = smul.addr %s1268, 8
        %s1270 = scalar_lea.vmem [#allocation12], %s1269
        // Predicated region
        $region84: #{tpu_custom_call.1} parent=71 // pred_check
          %p1271 = pneg %p340
        $region85: #{tpu_custom_call.1} parent=71 // pred_check_branch
          %1273 = sbr.rel (%p1271) target = $region87
        $region86: #{tpu_custom_call.1} parent=71 // pred_region
          %1275 = vsyncadd %s1267, 0
          %s1276 = smul.addr %s32, 2
          %s1277 = sadd.s32 %s33, %s1276
          %s1278 = smul.addr %s1277, 8
          %s1279 = scalar_lea.hbm %s13, %s1278
          %s1281 = sshll.u32 %s1270, 4
          %s1282 = int_to_ptr.vmem [resolvable:$true] %s1281
          %s1283 = sshll.u32 %s1279, 4
          %s1284 = int_to_ptr.hbm [resolvable:$true] %s1283
          %1286 = dma.vmem_to_hbm [thread:$0]  %s1282, 128, %s1284, %s1267
        $region87: #{tpu_custom_call.1} parent=71 // pred_fallthru
          _
      $region72: #{tpu_custom_call.1} parent=5 // pred_fallthru
        _
      %p1287 = scmp.le.s32.totalorder 2, %s23
      // Predicated region
      $region88: #{tpu_custom_call.1} parent=5 // pred_check
        %p1288 = pneg %p1287
      $region89: #{tpu_custom_call.1} parent=5 // pred_check_branch
        %1290 = sbr.rel (%p1288) target = $region91
      $region90: #{tpu_custom_call.1} parent=5 // pred_region
        %s1291 = ssub.s32 %s23, 2
        // Predicated region
        $region92: #{tpu_custom_call.1} parent=90 // pred_check
          %p1292 = pneg %p346
        $region93: #{tpu_custom_call.1} parent=90 // pred_check_branch
          %1294 = sbr.rel (%p1292) target = $region95
        $region94: #{tpu_custom_call.1} parent=90 // pred_region
          %s1295 = sand.u32 %s331, 1
          %s1296 = scalar_lea.sflag [#allocation11], %s1295
          %s1297 = sand.u32 %s331, 1
          %s1298 = smul.addr %s1297, 8
          %s1299 = scalar_lea.vmem [#allocation12], %s1298
          %1301 = dma.done %s1296, 128
        $region95: #{tpu_custom_call.1} parent=90 // pred_fallthru
          _
      $region91: #{tpu_custom_call.1} parent=5 // pred_fallthru
        _
    $region6: #{tpu_custom_call.1} parent=1 // loop_footer
      %s27 = sadd.s32 1, %s23
    $region7: #{tpu_custom_call.1} parent=1 // loop_footer_branch
      %22 = sbr.rel target = $region3
    $region8: #{tpu_custom_call.1} parent=1 // loop_exit
      _
    %1302 = vsyncpa [#allocation10], 1
    %s1303 = scalar_lea.sflag [#allocation10], 1
    %1304 = vsyncpa %s1303, 1
    %1305 = vsyncpa [#allocation11], 1
    %s1306 = scalar_lea.sflag [#allocation11], 1
    %1307 = vsyncpa %s1306, 1

</llo_original>
